<compile_context>
chip_gen: v7x
topology: tpu7x:2x2x1
jax: 0.10.0
libtpu: 0.0.40
codegen_flags: <defaults>
</compile_context>

<pallas_src>
import functools

import jax
import jax.numpy as jnp
from jax import lax
from jax.experimental import pallas as pl
from jax.experimental.pallas import tpu as pltpu


def _ffn_kernel(xp_ref, xc_ref, xn_ref, w1_ref, b1_ref, w2_ref, b2_ref,
                o_ref, h_ref, *, K, tT, hb, T_true):
    # xp_ref : (1, hb, C_in)      halo block just before this tile (index clamped at edges)
    # xc_ref : (1, tT, C_in)      current time tile
    # xn_ref : (1, hb, C_in)      halo block just after this tile (index clamped at edges)
    # w1_ref : (K, C_in, Hp)      conv1 weights, tap-major, bf16 (Hp lane-padded)
    # b1_ref : (1, Hp)            f32
    # w2_ref : (K, Hp, Cop)       conv2 weights, tap-major, bf16 (Cop lane-padded)
    # b2_ref : (1, Cop)           f32
    # o_ref  : (1, tT, Cop)
    # h_ref  : VMEM scratch (L_pad, Hp) bf16 — hidden activations incl. halo rows
    pad = (K - 1) // 2
    L = tT + 2 * pad                     # hidden rows needed by this tile
    t0 = pl.program_id(1) * tT

    # ---- assemble the halo'd input window (tT + 4*pad, C_in), bf16 ----
    xc = xc_ref[0]
    if pad > 0:
        xp = xp_ref[0][hb - 2 * pad:, :]          # 2*pad rows just before the tile
        xn = xn_ref[0][:2 * pad, :]               # 2*pad rows just after the tile
        # mask only the halo rows (clamped blocks at the sequence edges / beyond T);
        # tile-proper rows are already correct (zero-padded in the wrapper beyond T).
        gp = t0 - 2 * pad + lax.broadcasted_iota(jnp.int32, (2 * pad, 1), 0)
        gn = t0 + tT + lax.broadcasted_iota(jnp.int32, (2 * pad, 1), 0)
        xp = jnp.where((gp >= 0) & (gp < T_true), xp, jnp.zeros_like(xp))
        xn = jnp.where(gn < T_true, xn, jnp.zeros_like(xn))
        x_ext = jnp.concatenate([xp, xc, xn], axis=0)
    else:
        x_ext = xc

    # ---- conv1: K per-tap MXU matmuls, f32 accumulation (no im2col buffer) ----
    acc = jnp.dot(x_ext[0:L, :], w1_ref[0], preferred_element_type=jnp.float32)
    for j in range(1, K):
        acc = acc + jnp.dot(x_ext[j:j + L, :], w1_ref[j],
                            preferred_element_type=jnp.float32)
    acc = acc + b1_ref[...]
    # fused ReLU + hidden-row validity mask (conv2 zero-pads the hidden seq outside [0,T))
    gh = t0 - pad + lax.broadcasted_iota(jnp.int32, (L, 1), 0)
    valid = (gh >= 0) & (gh < T_true)
    h = jnp.where(valid & (acc > 0.0), acc, 0.0)
    # dropout: identity (inference)
    h_ref[pl.ds(0, L), :] = h.astype(h_ref.dtype)     # bf16 VMEM-resident hidden tile

    # ---- conv2: K per-tap matmuls reading the hidden tile directly ----
    acc2 = jnp.dot(h_ref[pl.ds(0, tT), :], w2_ref[0],
                   preferred_element_type=jnp.float32)
    for j in range(1, K):
        acc2 = acc2 + jnp.dot(h_ref[pl.ds(j, tT), :], w2_ref[j],
                              preferred_element_type=jnp.float32)
    o_ref[0] = (acc2 + b2_ref[...]).astype(o_ref.dtype)


def conv_feed_forward(x, w1, b1, w2, b2, kernel_size, *, tile_t=None):
    """Position-wise conv FFN in (B, T, C) layout.

    x  : (B, T, C_in) activations
    w1 : (K, C_in, H) conv1 weights, tap-major (== torch Conv1d weight.permute(2, 1, 0))
    b1 : (H,)
    w2 : (K, H, C_out) conv2 weights, tap-major
    b2 : (C_out,)
    """
    B, T, C_in = x.shape
    K = int(kernel_size)
    assert K % 2 == 1, "odd kernel_size assumed ('same' length padding)"
    pad = (K - 1) // 2
    H = w1.shape[2]
    C_out = w2.shape[2]

    def _rup(v, m):
        return -(-v // m) * m

    # lane-dense matmul N dims (hidden + output channels padded to a multiple of 128)
    H_p = _rup(H, 128)
    C_out_p = _rup(C_out, 128)

    # halo block: multiple of 16 rows (bf16 sublane packing), >= 2*pad
    hb = max(16, _rup(2 * pad, 16))

    # ---- generation-aware VMEM budget ----
    vmem_cap = 64 * 1024 * 1024                       # conservative default (v7x per-TC)
    try:
        vmem_cap = int(getattr(pltpu.get_tpu_info(), "vmem_capacity_bytes", vmem_cap))
    except Exception:
        pass
    vmem_limit = max(32 * 1024 * 1024, int(0.75 * vmem_cap))

    out_isz = jnp.dtype(x.dtype).itemsize

    def _vmem_need(tT, wbuf):
        # explicit per-step budget incl. in-kernel temporaries (x_ext, f32 acc's, casts)
        L = tT + 2 * pad
        L_pad = _rup(L, 16)
        Lx = tT + 4 * pad
        return (2 * tT * C_in * 2 + 4 * hb * C_in * 2          # x tile + halos (dbl buf)
                + 2 * tT * C_out_p * out_isz                    # output tile (dbl buf)
                + wbuf * K * (C_in * H_p + H_p * C_out_p) * 2   # resident weights
                + wbuf * (H_p + C_out_p) * 4                    # resident biases
                + L_pad * H_p * 2                               # hidden bf16 scratch
                + Lx * C_in * 2                                 # x_ext temp
                + L_pad * H_p * (4 + 2)                         # f32 acc1 + bf16 cast
                + tT * C_out_p * (4 + out_isz))                 # f32 acc2 + output cast

    if tile_t is None:
        # largest time tile (multiple of the halo block) fitting comfortably in budget
        tile_t = hb
        for cand in (1024, 512, 256, 128, 64, 32, 16):
            c = max(hb, (cand // hb) * hb)
            if _vmem_need(c, 1) <= 0.6 * vmem_limit:
                tile_t = c
                break
        # don't blow up tiny sequences into one huge padded tile
        while tile_t > hb and tile_t >= 2 * max(T, hb):
            tile_t = max(hb, ((tile_t // 2) // hb) * hb)
    tT = max(hb, (int(tile_t) // hb) * hb)            # multiple of hb (hence of 16)

    # pad T up to a multiple of tT (kernel masks by true T; output sliced back)
    nT = -(-T // tT)
    Tp = nT * tT
    x_in = x if Tp == T else jnp.pad(x, ((0, 0), (0, Tp - T), (0, 0)))

    # bf16 operands, f32 accumulation on the MXU; zero-pad the lane (N) dims
    x_bf = x_in.astype(jnp.bfloat16)
    w1p = jnp.pad(w1.astype(jnp.bfloat16), ((0, 0), (0, 0), (0, H_p - H)))
    w2p = jnp.pad(w2.astype(jnp.bfloat16), ((0, 0), (0, H_p - H), (0, C_out_p - C_out)))
    b1p = jnp.pad(b1.astype(jnp.float32), (0, H_p - H)).reshape(1, H_p)
    b2p = jnp.pad(b2.astype(jnp.float32), (0, C_out_p - C_out)).reshape(1, C_out_p)

    nHB = Tp // hb               # number of halo blocks along T
    tpb = tT // hb               # halo blocks per time tile
    L_pad = _rup(tT + 2 * pad, 16)

    kernel = functools.partial(_ffn_kernel, K=K, tT=tT, hb=hb, T_true=T)

    def _build(weight_mode):
        def wspec(shape):
            idx = lambda b, i: (0,) * len(shape)      # constant block -> VMEM resident
            if weight_mode is None:
                return pl.BlockSpec(shape, idx)
            return pl.BlockSpec(shape, idx, pipeline_mode=weight_mode)

        in_specs = [
            # previous-halo / current / next-halo windows of x
            pl.BlockSpec((1, hb, C_in),
                         lambda b, i: (b, jnp.maximum(i * tpb - 1, 0), 0)),
            pl.BlockSpec((1, tT, C_in), lambda b, i: (b, i, 0)),
            pl.BlockSpec((1, hb, C_in),
                         lambda b, i: (b, jnp.minimum((i + 1) * tpb, nHB - 1), 0)),
            # resident weights / biases
            wspec((K, C_in, H_p)),
            wspec((1, H_p)),
            wspec((K, H_p, C_out_p)),
            wspec((1, C_out_p)),
        ]
        return pl.pallas_call(
            kernel,
            out_shape=jax.ShapeDtypeStruct((B, Tp, C_out_p), x.dtype),
            grid_spec=pltpu.PrefetchScalarGridSpec(
                num_scalar_prefetch=0,
                grid=(B, nT),
                in_specs=in_specs,
                out_specs=pl.BlockSpec((1, tT, C_out_p), lambda b, i: (b, i, 0)),
                scratch_shapes=[pltpu.VMEM((L_pad, H_p), jnp.bfloat16)],
            ),
            compiler_params=pltpu.CompilerParams(
                dimension_semantics=("parallel", "parallel"),
                vmem_limit_bytes=vmem_limit),
        )

    args = (x_bf, x_bf, x_bf, w1p, b1p, w2p, b2p)
    try:
        # single-buffer the never-refetched resident weights (saves ~half the weight VMEM)
        out = _build(pl.Buffered(1))(*args)
    except Exception:
        # fallback: this jax build doesn't accept pipeline_mode on these BlockSpecs
        out = _build(None)(*args)

    if Tp != T or C_out_p != C_out:
        out = out[:, :T, :C_out]
    return out


def _reference(x, w1, b1, w2, b2, kernel_size):
    """Pure-JAX reference mirroring the kernel's bf16-operand / f32-accumulate math."""
    B, T, C_in = x.shape
    K = kernel_size
    pad = (K - 1) // 2
    xb = x.astype(jnp.bfloat16).astype(jnp.float32)
    w1b = w1.astype(jnp.bfloat16).astype(jnp.float32)
    w2b = w2.astype(jnp.bfloat16).astype(jnp.float32)

    def conv(inp, w, b):
        xp = jnp.pad(inp, ((0, 0), (pad, pad), (0, 0)))
        acc = jnp.zeros((B, T, w.shape[2]), jnp.float32)
        for j in range(K):
            acc = acc + jnp.einsum('btc,cd->btd', xp[:, j:j + T, :], w[j])
        return acc + b

    h = jax.nn.relu(conv(xb, w1b, b1.astype(jnp.float32)))
    h = h.astype(jnp.bfloat16).astype(jnp.float32)   # kernel stores hidden in bf16
    return conv(h, w2b, b2.astype(jnp.float32))


if __name__ == "__main__":
    # small shapes consistent with the module's forward
    batch = 2
    seq = 40            # not a multiple of tile_t -> exercises the T-padding/mask path
    input_size = 32
    hidden_size = 64
    kernel_size = 3
    dropout_rate = 0.1  # identity at inference

    key = jax.random.PRNGKey(0)
    k_x, k_w1, k_b1, k_w2, k_b2 = jax.random.split(key, 5)

    x = jax.random.normal(k_x, (batch, seq, input_size), jnp.float32)
    # deterministic synthetic parameters, stored tap-major (K, C_in, C_out)
    w1 = jax.random.normal(k_w1, (kernel_size, input_size, hidden_size), jnp.float32) * 0.1
    b1 = jax.random.normal(k_b1, (hidden_size,), jnp.float32) * 0.1
    w2 = jax.random.normal(k_w2, (kernel_size, hidden_size, input_size), jnp.float32) * 0.1
    b2 = jax.random.normal(k_b2, (input_size,), jnp.float32) * 0.1

    # tile_t=16 so the small test exercises multiple time tiles, the clamped-halo
    # masking at both sequence edges, and the T -> multiple-of-tile padding.
    y = conv_feed_forward(x, w1, b1, w2, b2, kernel_size, tile_t=16)
    y = jax.block_until_ready(y)

    y_ref = _reference(x, w1, b1, w2, b2, kernel_size)
    assert y.shape == (batch, seq, input_size)
    max_err = float(jnp.max(jnp.abs(y - y_ref)))
    assert jnp.allclose(y, y_ref, atol=2e-2, rtol=2e-2), f"mismatch vs reference (max err {max_err})"

    print("KERNEL_OK")
</pallas_src>

<mosaic_0001>
module attributes {stable_mosaic.version = 11 : i64} {
  func.func @_ffn_kernel(%arg0: i32, %arg1: i32, %arg2: memref<1x16x32xbf16, #tpu.memory_space<vmem>>, %arg3: memref<1x16x32xbf16, #tpu.memory_space<vmem>>, %arg4: memref<1x16x32xbf16, #tpu.memory_space<vmem>>, %arg5: memref<3x32x128xbf16, #tpu.memory_space<vmem>>, %arg6: memref<1x128xf32, #tpu.memory_space<vmem>>, %arg7: memref<3x128x128xbf16, #tpu.memory_space<vmem>>, %arg8: memref<1x128xf32, #tpu.memory_space<vmem>>, %arg9: memref<1x16x128xf32, #tpu.memory_space<vmem>>, %arg10: memref<32x128xbf16, #tpu.memory_space<vmem>>) attributes {dimension_semantics = [#tpu.dimension_semantics<parallel>, #tpu.dimension_semantics<parallel>], iteration_bounds = array<i64: 2, 3>, scalar_prefetch = 0 : i64, scratch_operands = 1 : i64, tpu.core_type = #tpu.core_type<tc>, window_params = [{transform_indices = @transform_0, window_bounds = array<i64: 1, 16, 32>}, {transform_indices = @transform_1, window_bounds = array<i64: 1, 16, 32>}, {transform_indices = @transform_2, window_bounds = array<i64: 1, 16, 32>}, {pipeline_mode = #tpu.pipeline_mode<synchronous>, transform_indices = @transform_3, window_bounds = array<i64: 3, 32, 128>}, {pipeline_mode = #tpu.pipeline_mode<synchronous>, transform_indices = @transform_4, window_bounds = array<i64: 1, 128>}, {pipeline_mode = #tpu.pipeline_mode<synchronous>, transform_indices = @transform_5, window_bounds = array<i64: 3, 128, 128>}, {pipeline_mode = #tpu.pipeline_mode<synchronous>, transform_indices = @transform_6, window_bounds = array<i64: 1, 128>}, {transform_indices = @transform_7, window_bounds = array<i64: 1, 16, 128>}]} {
    %c16_i32 = arith.constant 16 : i32
    %0 = arith.muli %arg1, %c16_i32 : i32
    %c0 = arith.constant 0 : index
    %c0_0 = arith.constant 0 : index
    %c0_1 = arith.constant 0 : index
    %1 = vector.load %arg3[%c0, %c0_0, %c0_1] : memref<1x16x32xbf16, #tpu.memory_space<vmem>>, vector<1x16x32xbf16>
    %2 = vector.shape_cast %1 : vector<1x16x32xbf16> to vector<16x32xbf16>
    %c0_2 = arith.constant 0 : index
    %c0_3 = arith.constant 0 : index
    %c0_4 = arith.constant 0 : index
    %3 = vector.load %arg2[%c0_2, %c0_3, %c0_4] : memref<1x16x32xbf16, #tpu.memory_space<vmem>>, vector<1x16x32xbf16>
    %4 = vector.shape_cast %3 : vector<1x16x32xbf16> to vector<16x32xbf16>
    %5 = vector.extract_strided_slice %4 {offsets = [14, 0], sizes = [2, 32], strides = [1, 1]} : vector<16x32xbf16> to vector<2x32xbf16>
    %c0_5 = arith.constant 0 : index
    %c0_6 = arith.constant 0 : index
    %c0_7 = arith.constant 0 : index
    %6 = vector.load %arg4[%c0_5, %c0_6, %c0_7] : memref<1x16x32xbf16, #tpu.memory_space<vmem>>, vector<1x16x32xbf16>
    %7 = vector.shape_cast %6 : vector<1x16x32xbf16> to vector<16x32xbf16>
    %8 = vector.extract_strided_slice %7 {offsets = [0, 0], sizes = [2, 32], strides = [1, 1]} : vector<16x32xbf16> to vector<2x32xbf16>
    %c2_i32 = arith.constant 2 : i32
    %9 = arith.subi %0, %c2_i32 : i32
    %10 = tpu.iota {dimensions = array<i32: 0>} : vector<2x1xi32>
    %11 = vector.broadcast %9 : i32 to vector<2x1xi32>
    %12 = arith.addi %11, %10 : vector<2x1xi32>
    %c16_i32_8 = arith.constant 16 : i32
    %13 = arith.addi %0, %c16_i32_8 : i32
    %14 = tpu.iota {dimensions = array<i32: 0>} : vector<2x1xi32>
    %15 = vector.broadcast %13 : i32 to vector<2x1xi32>
    %16 = arith.addi %15, %14 : vector<2x1xi32>
    %c0_i32 = arith.constant 0 : i32
    %17 = vector.broadcast %c0_i32 : i32 to vector<2x1xi32>
    %18 = arith.cmpi sge, %12, %17 : vector<2x1xi32>
    %c40_i32 = arith.constant 40 : i32
    %19 = vector.broadcast %c40_i32 : i32 to vector<2x1xi32>
    %20 = arith.cmpi slt, %12, %19 : vector<2x1xi32>
    %21 = arith.andi %18, %20 : vector<2x1xi1>
    %cst = arith.constant 0.000000e+00 : bf16
    %22 = vector.broadcast %cst : bf16 to vector<2x32xbf16>
    %23 = vector.shape_cast %21 : vector<2x1xi1> to vector<2x1xi1>
    %24 = vector.broadcast %23 : vector<2x1xi1> to vector<2x32xi1>
    %25 = arith.select %24, %5, %22 : vector<2x32xi1>, vector<2x32xbf16>
    %c40_i32_9 = arith.constant 40 : i32
    %26 = vector.broadcast %c40_i32_9 : i32 to vector<2x1xi32>
    %27 = arith.cmpi slt, %16, %26 : vector<2x1xi32>
    %cst_10 = arith.constant 0.000000e+00 : bf16
    %28 = vector.broadcast %cst_10 : bf16 to vector<2x32xbf16>
    %29 = vector.shape_cast %27 : vector<2x1xi1> to vector<2x1xi1>
    %30 = vector.broadcast %29 : vector<2x1xi1> to vector<2x32xi1>
    %31 = arith.select %30, %8, %28 : vector<2x32xi1>, vector<2x32xbf16>
    %32 = tpu.concatenate %25, %2, %31 in 0 : vector<2x32xbf16>, vector<16x32xbf16>, vector<2x32xbf16> -> vector<20x32xbf16>
    %33 = vector.extract_strided_slice %32 {offsets = [0, 0], sizes = [18, 32], strides = [1, 1]} : vector<20x32xbf16> to vector<18x32xbf16>
    %c0_11 = arith.constant 0 : index
    %c0_12 = arith.constant 0 : index
    %c0_13 = arith.constant 0 : index
    %34 = vector.load %arg5[%c0_11, %c0_12, %c0_13] : memref<3x32x128xbf16, #tpu.memory_space<vmem>>, vector<1x32x128xbf16>
    %35 = vector.shape_cast %34 : vector<1x32x128xbf16> to vector<32x128xbf16>
    %cst_14 = arith.constant dense<0.000000e+00> : vector<18x128xf32>
    %36 = tpu.matmul %33, %35, %cst_14 {dimension_numbers = #tpu.dot_dimension_numbers<[1], [0], [0], [1], [0, 0, 1, 1], [], []>} : vector<18x32xbf16>, vector<32x128xbf16>, vector<18x128xf32> -> vector<18x128xf32>
    %37 = vector.extract_strided_slice %32 {offsets = [1, 0], sizes = [18, 32], strides = [1, 1]} : vector<20x32xbf16> to vector<18x32xbf16>
    %c1 = arith.constant 1 : index
    %c0_15 = arith.constant 0 : index
    %c0_16 = arith.constant 0 : index
    %38 = vector.load %arg5[%c1, %c0_15, %c0_16] : memref<3x32x128xbf16, #tpu.memory_space<vmem>>, vector<1x32x128xbf16>
    %39 = vector.shape_cast %38 : vector<1x32x128xbf16> to vector<32x128xbf16>
    %cst_17 = arith.constant dense<0.000000e+00> : vector<18x128xf32>
    %40 = tpu.matmul %37, %39, %cst_17 {dimension_numbers = #tpu.dot_dimension_numbers<[1], [0], [0], [1], [0, 0, 1, 1], [], []>} : vector<18x32xbf16>, vector<32x128xbf16>, vector<18x128xf32> -> vector<18x128xf32>
    %41 = arith.addf %36, %40 : vector<18x128xf32>
    %42 = vector.extract_strided_slice %32 {offsets = [2, 0], sizes = [18, 32], strides = [1, 1]} : vector<20x32xbf16> to vector<18x32xbf16>
    %c2 = arith.constant 2 : index
    %c0_18 = arith.constant 0 : index
    %c0_19 = arith.constant 0 : index
    %43 = vector.load %arg5[%c2, %c0_18, %c0_19] : memref<3x32x128xbf16, #tpu.memory_space<vmem>>, vector<1x32x128xbf16>
    %44 = vector.shape_cast %43 : vector<1x32x128xbf16> to vector<32x128xbf16>
    %cst_20 = arith.constant dense<0.000000e+00> : vector<18x128xf32>
    %45 = tpu.matmul %42, %44, %cst_20 {dimension_numbers = #tpu.dot_dimension_numbers<[1], [0], [0], [1], [0, 0, 1, 1], [], []>} : vector<18x32xbf16>, vector<32x128xbf16>, vector<18x128xf32> -> vector<18x128xf32>
    %46 = arith.addf %41, %45 : vector<18x128xf32>
    %c0_21 = arith.constant 0 : index
    %c0_22 = arith.constant 0 : index
    %47 = vector.load %arg6[%c0_21, %c0_22] : memref<1x128xf32, #tpu.memory_space<vmem>>, vector<1x128xf32>
    %48 = vector.broadcast %47 : vector<1x128xf32> to vector<18x128xf32>
    %49 = arith.addf %46, %48 : vector<18x128xf32>
    %c1_i32 = arith.constant 1 : i32
    %50 = arith.subi %0, %c1_i32 : i32
    %51 = tpu.iota {dimensions = array<i32: 0>} : vector<18x1xi32>
    %52 = vector.broadcast %50 : i32 to vector<18x1xi32>
    %53 = arith.addi %52, %51 : vector<18x1xi32>
    %c0_i32_23 = arith.constant 0 : i32
    %54 = vector.broadcast %c0_i32_23 : i32 to vector<18x1xi32>
    %55 = arith.cmpi sge, %53, %54 : vector<18x1xi32>
    %c40_i32_24 = arith.constant 40 : i32
    %56 = vector.broadcast %c40_i32_24 : i32 to vector<18x1xi32>
    %57 = arith.cmpi slt, %53, %56 : vector<18x1xi32>
    %58 = arith.andi %55, %57 : vector<18x1xi1>
    %cst_25 = arith.constant 0.000000e+00 : f32
    %59 = vector.broadcast %cst_25 : f32 to vector<18x128xf32>
    %60 = arith.cmpf ogt, %49, %59 : vector<18x128xf32>
    %61 = vector.broadcast %58 : vector<18x1xi1> to vector<18x128xi1>
    %62 = arith.andi %61, %60 : vector<18x128xi1>
    %cst_26 = arith.constant 0.000000e+00 : f32
    %63 = vector.broadcast %cst_26 : f32 to vector<18x128xf32>
    %64 = arith.select %62, %49, %63 : vector<18x128xi1>, vector<18x128xf32>
    %65 = arith.truncf %64 : vector<18x128xf32> to vector<18x128xbf16>
    %c0_27 = arith.constant 0 : index
    %c0_28 = arith.constant 0 : index
    %66 = vector.load %arg10[%c0_27, %c0_28] : memref<32x128xbf16, #tpu.memory_space<vmem>>, vector<18x128xbf16>
    tpu.vector_store %arg10[%c0_27, %c0_28], %65 {strides = array<i32>} : memref<32x128xbf16, #tpu.memory_space<vmem>>, vector<18x128xbf16>,
    %c0_29 = arith.constant 0 : index
    %c0_30 = arith.constant 0 : index
    %67 = vector.load %arg10[%c0_29, %c0_30] : memref<32x128xbf16, #tpu.memory_space<vmem>>, vector<16x128xbf16>
    %c0_31 = arith.constant 0 : index
    %c0_32 = arith.constant 0 : index
    %c0_33 = arith.constant 0 : index
    %68 = vector.load %arg7[%c0_31, %c0_32, %c0_33] : memref<3x128x128xbf16, #tpu.memory_space<vmem>>, vector<1x128x128xbf16>
    %69 = vector.shape_cast %68 : vector<1x128x128xbf16> to vector<128x128xbf16>
    %cst_34 = arith.constant dense<0.000000e+00> : vector<16x128xf32>
    %70 = tpu.matmul %67, %69, %cst_34 {dimension_numbers = #tpu.dot_dimension_numbers<[1], [0], [0], [1], [0, 0, 1, 1], [], []>} : vector<16x128xbf16>, vector<128x128xbf16>, vector<16x128xf32> -> vector<16x128xf32>
    %c1_35 = arith.constant 1 : index
    %c0_36 = arith.constant 0 : index
    %71 = vector.load %arg10[%c1_35, %c0_36] : memref<32x128xbf16, #tpu.memory_space<vmem>>, vector<16x128xbf16>
    %c1_37 = arith.constant 1 : index
    %c0_38 = arith.constant 0 : index
    %c0_39 = arith.constant 0 : index
    %72 = vector.load %arg7[%c1_37, %c0_38, %c0_39] : memref<3x128x128xbf16, #tpu.memory_space<vmem>>, vector<1x128x128xbf16>
    %73 = vector.shape_cast %72 : vector<1x128x128xbf16> to vector<128x128xbf16>
    %cst_40 = arith.constant dense<0.000000e+00> : vector<16x128xf32>
    %74 = tpu.matmul %71, %73, %cst_40 {dimension_numbers = #tpu.dot_dimension_numbers<[1], [0], [0], [1], [0, 0, 1, 1], [], []>} : vector<16x128xbf16>, vector<128x128xbf16>, vector<16x128xf32> -> vector<16x128xf32>
    %75 = arith.addf %70, %74 : vector<16x128xf32>
    %c2_41 = arith.constant 2 : index
    %c0_42 = arith.constant 0 : index
    %76 = vector.load %arg10[%c2_41, %c0_42] : memref<32x128xbf16, #tpu.memory_space<vmem>>, vector<16x128xbf16>
    %c2_43 = arith.constant 2 : index
    %c0_44 = arith.constant 0 : index
    %c0_45 = arith.constant 0 : index
    %77 = vector.load %arg7[%c2_43, %c0_44, %c0_45] : memref<3x128x128xbf16, #tpu.memory_space<vmem>>, vector<1x128x128xbf16>
    %78 = vector.shape_cast %77 : vector<1x128x128xbf16> to vector<128x128xbf16>
    %cst_46 = arith.constant dense<0.000000e+00> : vector<16x128xf32>
    %79 = tpu.matmul %76, %78, %cst_46 {dimension_numbers = #tpu.dot_dimension_numbers<[1], [0], [0], [1], [0, 0, 1, 1], [], []>} : vector<16x128xbf16>, vector<128x128xbf16>, vector<16x128xf32> -> vector<16x128xf32>
    %80 = arith.addf %75, %79 : vector<16x128xf32>
    %c0_47 = arith.constant 0 : index
    %c0_48 = arith.constant 0 : index
    %81 = vector.load %arg8[%c0_47, %c0_48] : memref<1x128xf32, #tpu.memory_space<vmem>>, vector<1x128xf32>
    %82 = vector.broadcast %81 : vector<1x128xf32> to vector<16x128xf32>
    %83 = arith.addf %80, %82 : vector<16x128xf32>
    %c0_49 = arith.constant 0 : index
    %c0_50 = arith.constant 0 : index
    %c0_51 = arith.constant 0 : index
    %84 = vector.load %arg9[%c0_49, %c0_50, %c0_51] : memref<1x16x128xf32, #tpu.memory_space<vmem>>, vector<1x16x128xf32>
    %85 = vector.shape_cast %84 : vector<1x16x128xf32> to vector<16x128xf32>
    %86 = vector.shape_cast %83 : vector<16x128xf32> to vector<1x16x128xf32>
    tpu.vector_store %arg9[%c0_49, %c0_50, %c0_51], %86 {strides = array<i32>} : memref<1x16x128xf32, #tpu.memory_space<vmem>>, vector<1x16x128xf32>,
    return
  }
  func.func @transform_0(%arg0: i32, %arg1: i32) -> (i32, i32, i32) {
    %c1_i32 = arith.constant 1 : i32
    %0 = arith.muli %arg1, %c1_i32 : i32
    %c1_i32_0 = arith.constant 1 : i32
    %1 = arith.subi %0, %c1_i32_0 : i32
    %c0_i32 = arith.constant 0 : i32
    %2 = arith.maxsi %1, %c0_i32 : i32
    %c0_i32_1 = arith.constant 0 : i32
    %c0_i32_2 = arith.constant 0 : i32
    return %arg0, %2, %c0_i32_1 : i32, i32, i32
  }
  func.func @transform_1(%arg0: i32, %arg1: i32) -> (i32, i32, i32) {
    %c0_i32 = arith.constant 0 : i32
    %c0_i32_0 = arith.constant 0 : i32
    return %arg0, %arg1, %c0_i32 : i32, i32, i32
  }
  func.func @transform_2(%arg0: i32, %arg1: i32) -> (i32, i32, i32) {
    %c1_i32 = arith.constant 1 : i32
    %0 = arith.addi %arg1, %c1_i32 : i32
    %c1_i32_0 = arith.constant 1 : i32
    %1 = arith.muli %0, %c1_i32_0 : i32
    %c2_i32 = arith.constant 2 : i32
    %2 = arith.minsi %1, %c2_i32 : i32
    %c0_i32 = arith.constant 0 : i32
    %c0_i32_1 = arith.constant 0 : i32
    return %arg0, %2, %c0_i32 : i32, i32, i32
  }
  func.func @transform_3(%arg0: i32, %arg1: i32) -> (i32, i32, i32) {
    %c0_i32 = arith.constant 0 : i32
    %c0_i32_0 = arith.constant 0 : i32
    %c0_i32_1 = arith.constant 0 : i32
    %c0_i32_2 = arith.constant 0 : i32
    return %c0_i32, %c0_i32_0, %c0_i32_1 : i32, i32, i32
  }
  func.func @transform_4(%arg0: i32, %arg1: i32) -> (i32, i32) {
    %c0_i32 = arith.constant 0 : i32
    %c0_i32_0 = arith.constant 0 : i32
    %c0_i32_1 = arith.constant 0 : i32
    return %c0_i32, %c0_i32_0 : i32, i32
  }
  func.func @transform_5(%arg0: i32, %arg1: i32) -> (i32, i32, i32) {
    %c0_i32 = arith.constant 0 : i32
    %c0_i32_0 = arith.constant 0 : i32
    %c0_i32_1 = arith.constant 0 : i32
    %c0_i32_2 = arith.constant 0 : i32
    return %c0_i32, %c0_i32_0, %c0_i32_1 : i32, i32, i32
  }
  func.func @transform_6(%arg0: i32, %arg1: i32) -> (i32, i32) {
    %c0_i32 = arith.constant 0 : i32
    %c0_i32_0 = arith.constant 0 : i32
    %c0_i32_1 = arith.constant 0 : i32
    return %c0_i32, %c0_i32_0 : i32, i32
  }
  func.func @transform_7(%arg0: i32, %arg1: i32) -> (i32, i32, i32) {
    %c0_i32 = arith.constant 0 : i32
    %c0_i32_0 = arith.constant 0 : i32
    return %arg0, %arg1, %c0_i32 : i32, i32, i32
  }
}

module attributes {stable_mosaic.version = 11 : i64} {
  func.func @_ffn_kernel(%arg0: i32, %arg1: i32, %arg2: memref<1x16x32xbf16, #tpu.memory_space<vmem>>, %arg3: memref<1x16x32xbf16, #tpu.memory_space<vmem>>, %arg4: memref<1x16x32xbf16, #tpu.memory_space<vmem>>, %arg5: memref<3x32x128xbf16, #tpu.memory_space<vmem>>, %arg6: memref<1x128xf32, #tpu.memory_space<vmem>>, %arg7: memref<3x128x128xbf16, #tpu.memory_space<vmem>>, %arg8: memref<1x128xf32, #tpu.memory_space<vmem>>, %arg9: memref<1x16x128xf32, #tpu.memory_space<vmem>>, %arg10: memref<32x128xbf16, #tpu.memory_space<vmem>>) attributes {dimension_semantics = [#tpu.dimension_semantics<parallel>, #tpu.dimension_semantics<parallel>], iteration_bounds = array<i64: 2, 3>, scalar_prefetch = 0 : i64, scratch_operands = 1 : i64, tpu.core_type = #tpu.core_type<tc>, window_params = [{transform_indices = @transform_0, window_bounds = array<i64: 1, 16, 32>}, {transform_indices = @transform_1, window_bounds = array<i64: 1, 16, 32>}, {transform_indices = @transform_2, window_bounds = array<i64: 1, 16, 32>}, {pipeline_mode = #tpu.pipeline_mode<synchronous>, transform_indices = @transform_3, window_bounds = array<i64: 3, 32, 128>}, {pipeline_mode = #tpu.pipeline_mode<synchronous>, transform_indices = @transform_4, window_bounds = array<i64: 1, 128>}, {pipeline_mode = #tpu.pipeline_mode<synchronous>, transform_indices = @transform_5, window_bounds = array<i64: 3, 128, 128>}, {pipeline_mode = #tpu.pipeline_mode<synchronous>, transform_indices = @transform_6, window_bounds = array<i64: 1, 128>}, {transform_indices = @transform_7, window_bounds = array<i64: 1, 16, 128>}]} {
    %c16_i32 = arith.constant 16 : i32
    %0 = arith.muli %arg1, %c16_i32 : i32
    %c0 = arith.constant 0 : index
    %c0_0 = arith.constant 0 : index
    %c0_1 = arith.constant 0 : index
    %1 = vector.load %arg3[%c0, %c0_0, %c0_1] : memref<1x16x32xbf16, #tpu.memory_space<vmem>>, vector<1x16x32xbf16>
    %2 = vector.shape_cast %1 : vector<1x16x32xbf16> to vector<16x32xbf16>
    %c0_2 = arith.constant 0 : index
    %c0_3 = arith.constant 0 : index
    %c0_4 = arith.constant 0 : index
    %3 = vector.load %arg2[%c0_2, %c0_3, %c0_4] : memref<1x16x32xbf16, #tpu.memory_space<vmem>>, vector<1x16x32xbf16>
    %4 = vector.shape_cast %3 : vector<1x16x32xbf16> to vector<16x32xbf16>
    %5 = vector.extract_strided_slice %4 {offsets = [14, 0], sizes = [2, 32], strides = [1, 1]} : vector<16x32xbf16> to vector<2x32xbf16>
    %c0_5 = arith.constant 0 : index
    %c0_6 = arith.constant 0 : index
    %c0_7 = arith.constant 0 : index
    %6 = vector.load %arg4[%c0_5, %c0_6, %c0_7] : memref<1x16x32xbf16, #tpu.memory_space<vmem>>, vector<1x16x32xbf16>
    %7 = vector.shape_cast %6 : vector<1x16x32xbf16> to vector<16x32xbf16>
    %8 = vector.extract_strided_slice %7 {offsets = [0, 0], sizes = [2, 32], strides = [1, 1]} : vector<16x32xbf16> to vector<2x32xbf16>
    %c2_i32 = arith.constant 2 : i32
    %9 = arith.subi %0, %c2_i32 : i32
    %10 = tpu.iota {dimensions = array<i32: 0>} : vector<2x1xi32>
    %11 = vector.broadcast %9 : i32 to vector<2x1xi32>
    %12 = arith.addi %11, %10 : vector<2x1xi32>
    %c16_i32_8 = arith.constant 16 : i32
    %13 = arith.addi %0, %c16_i32_8 : i32
    %14 = tpu.iota {dimensions = array<i32: 0>} : vector<2x1xi32>
    %15 = vector.broadcast %13 : i32 to vector<2x1xi32>
    %16 = arith.addi %15, %14 : vector<2x1xi32>
    %c0_i32 = arith.constant 0 : i32
    %17 = vector.broadcast %c0_i32 : i32 to vector<2x1xi32>
    %18 = arith.cmpi sge, %12, %17 : vector<2x1xi32>
    %c40_i32 = arith.constant 40 : i32
    %19 = vector.broadcast %c40_i32 : i32 to vector<2x1xi32>
    %20 = arith.cmpi slt, %12, %19 : vector<2x1xi32>
    %21 = arith.andi %18, %20 : vector<2x1xi1>
    %cst = arith.constant 0.000000e+00 : bf16
    %22 = vector.broadcast %cst : bf16 to vector<2x32xbf16>
    %23 = vector.shape_cast %21 : vector<2x1xi1> to vector<2x1xi1>
    %24 = vector.broadcast %23 : vector<2x1xi1> to vector<2x32xi1>
    %25 = arith.select %24, %5, %22 : vector<2x32xi1>, vector<2x32xbf16>
    %c40_i32_9 = arith.constant 40 : i32
    %26 = vector.broadcast %c40_i32_9 : i32 to vector<2x1xi32>
    %27 = arith.cmpi slt, %16, %26 : vector<2x1xi32>
    %cst_10 = arith.constant 0.000000e+00 : bf16
    %28 = vector.broadcast %cst_10 : bf16 to vector<2x32xbf16>
    %29 = vector.shape_cast %27 : vector<2x1xi1> to vector<2x1xi1>
    %30 = vector.broadcast %29 : vector<2x1xi1> to vector<2x32xi1>
    %31 = arith.select %30, %8, %28 : vector<2x32xi1>, vector<2x32xbf16>
    %32 = tpu.concatenate %25, %2, %31 in 0 : vector<2x32xbf16>, vector<16x32xbf16>, vector<2x32xbf16> -> vector<20x32xbf16>
    %33 = vector.extract_strided_slice %32 {offsets = [0, 0], sizes = [18, 32], strides = [1, 1]} : vector<20x32xbf16> to vector<18x32xbf16>
    %c0_11 = arith.constant 0 : index
    %c0_12 = arith.constant 0 : index
    %c0_13 = arith.constant 0 : index
    %34 = vector.load %arg5[%c0_11, %c0_12, %c0_13] : memref<3x32x128xbf16, #tpu.memory_space<vmem>>, vector<1x32x128xbf16>
    %35 = vector.shape_cast %34 : vector<1x32x128xbf16> to vector<32x128xbf16>
    %cst_14 = arith.constant dense<0.000000e+00> : vector<18x128xf32>
    %36 = tpu.matmul %33, %35, %cst_14 {dimension_numbers = #tpu.dot_dimension_numbers<[1], [0], [0], [1], [0, 0, 1, 1], [], []>} : vector<18x32xbf16>, vector<32x128xbf16>, vector<18x128xf32> -> vector<18x128xf32>
    %37 = vector.extract_strided_slice %32 {offsets = [1, 0], sizes = [18, 32], strides = [1, 1]} : vector<20x32xbf16> to vector<18x32xbf16>
    %c1 = arith.constant 1 : index
    %c0_15 = arith.constant 0 : index
    %c0_16 = arith.constant 0 : index
    %38 = vector.load %arg5[%c1, %c0_15, %c0_16] : memref<3x32x128xbf16, #tpu.memory_space<vmem>>, vector<1x32x128xbf16>
    %39 = vector.shape_cast %38 : vector<1x32x128xbf16> to vector<32x128xbf16>
    %cst_17 = arith.constant dense<0.000000e+00> : vector<18x128xf32>
    %40 = tpu.matmul %37, %39, %cst_17 {dimension_numbers = #tpu.dot_dimension_numbers<[1], [0], [0], [1], [0, 0, 1, 1], [], []>} : vector<18x32xbf16>, vector<32x128xbf16>, vector<18x128xf32> -> vector<18x128xf32>
    %41 = arith.addf %36, %40 : vector<18x128xf32>
    %42 = vector.extract_strided_slice %32 {offsets = [2, 0], sizes = [18, 32], strides = [1, 1]} : vector<20x32xbf16> to vector<18x32xbf16>
    %c2 = arith.constant 2 : index
    %c0_18 = arith.constant 0 : index
    %c0_19 = arith.constant 0 : index
    %43 = vector.load %arg5[%c2, %c0_18, %c0_19] : memref<3x32x128xbf16, #tpu.memory_space<vmem>>, vector<1x32x128xbf16>
    %44 = vector.shape_cast %43 : vector<1x32x128xbf16> to vector<32x128xbf16>
    %cst_20 = arith.constant dense<0.000000e+00> : vector<18x128xf32>
    %45 = tpu.matmul %42, %44, %cst_20 {dimension_numbers = #tpu.dot_dimension_numbers<[1], [0], [0], [1], [0, 0, 1, 1], [], []>} : vector<18x32xbf16>, vector<32x128xbf16>, vector<18x128xf32> -> vector<18x128xf32>
    %46 = arith.addf %41, %45 : vector<18x128xf32>
    %c0_21 = arith.constant 0 : index
    %c0_22 = arith.constant 0 : index
    %47 = vector.load %arg6[%c0_21, %c0_22] : memref<1x128xf32, #tpu.memory_space<vmem>>, vector<1x128xf32>
    %48 = vector.broadcast %47 : vector<1x128xf32> to vector<18x128xf32>
    %49 = arith.addf %46, %48 : vector<18x128xf32>
    %c1_i32 = arith.constant 1 : i32
    %50 = arith.subi %0, %c1_i32 : i32
    %51 = tpu.iota {dimensions = array<i32: 0>} : vector<18x1xi32>
    %52 = vector.broadcast %50 : i32 to vector<18x1xi32>
    %53 = arith.addi %52, %51 : vector<18x1xi32>
    %c0_i32_23 = arith.constant 0 : i32
    %54 = vector.broadcast %c0_i32_23 : i32 to vector<18x1xi32>
    %55 = arith.cmpi sge, %53, %54 : vector<18x1xi32>
    %c40_i32_24 = arith.constant 40 : i32
    %56 = vector.broadcast %c40_i32_24 : i32 to vector<18x1xi32>
    %57 = arith.cmpi slt, %53, %56 : vector<18x1xi32>
    %58 = arith.andi %55, %57 : vector<18x1xi1>
    %cst_25 = arith.constant 0.000000e+00 : f32
    %59 = vector.broadcast %cst_25 : f32 to vector<18x128xf32>
    %60 = arith.cmpf ogt, %49, %59 : vector<18x128xf32>
    %61 = vector.broadcast %58 : vector<18x1xi1> to vector<18x128xi1>
    %62 = arith.andi %61, %60 : vector<18x128xi1>
    %cst_26 = arith.constant 0.000000e+00 : f32
    %63 = vector.broadcast %cst_26 : f32 to vector<18x128xf32>
    %64 = arith.select %62, %49, %63 : vector<18x128xi1>, vector<18x128xf32>
    %65 = arith.truncf %64 : vector<18x128xf32> to vector<18x128xbf16>
    %c0_27 = arith.constant 0 : index
    %c0_28 = arith.constant 0 : index
    %66 = vector.load %arg10[%c0_27, %c0_28] : memref<32x128xbf16, #tpu.memory_space<vmem>>, vector<18x128xbf16>
    tpu.vector_store %arg10[%c0_27, %c0_28], %65 {strides = array<i32>} : memref<32x128xbf16, #tpu.memory_space<vmem>>, vector<18x128xbf16>,
    %c0_29 = arith.constant 0 : index
    %c0_30 = arith.constant 0 : index
    %67 = vector.load %arg10[%c0_29, %c0_30] : memref<32x128xbf16, #tpu.memory_space<vmem>>, vector<16x128xbf16>
    %c0_31 = arith.constant 0 : index
    %c0_32 = arith.constant 0 : index
    %c0_33 = arith.constant 0 : index
    %68 = vector.load %arg7[%c0_31, %c0_32, %c0_33] : memref<3x128x128xbf16, #tpu.memory_space<vmem>>, vector<1x128x128xbf16>
    %69 = vector.shape_cast %68 : vector<1x128x128xbf16> to vector<128x128xbf16>
    %cst_34 = arith.constant dense<0.000000e+00> : vector<16x128xf32>
    %70 = tpu.matmul %67, %69, %cst_34 {dimension_numbers = #tpu.dot_dimension_numbers<[1], [0], [0], [1], [0, 0, 1, 1], [], []>} : vector<16x128xbf16>, vector<128x128xbf16>, vector<16x128xf32> -> vector<16x128xf32>
    %c1_35 = arith.constant 1 : index
    %c0_36 = arith.constant 0 : index
    %71 = vector.load %arg10[%c1_35, %c0_36] : memref<32x128xbf16, #tpu.memory_space<vmem>>, vector<16x128xbf16>
    %c1_37 = arith.constant 1 : index
    %c0_38 = arith.constant 0 : index
    %c0_39 = arith.constant 0 : index
    %72 = vector.load %arg7[%c1_37, %c0_38, %c0_39] : memref<3x128x128xbf16, #tpu.memory_space<vmem>>, vector<1x128x128xbf16>
    %73 = vector.shape_cast %72 : vector<1x128x128xbf16> to vector<128x128xbf16>
    %cst_40 = arith.constant dense<0.000000e+00> : vector<16x128xf32>
    %74 = tpu.matmul %71, %73, %cst_40 {dimension_numbers = #tpu.dot_dimension_numbers<[1], [0], [0], [1], [0, 0, 1, 1], [], []>} : vector<16x128xbf16>, vector<128x128xbf16>, vector<16x128xf32> -> vector<16x128xf32>
    %75 = arith.addf %70, %74 : vector<16x128xf32>
    %c2_41 = arith.constant 2 : index
    %c0_42 = arith.constant 0 : index
    %76 = vector.load %arg10[%c2_41, %c0_42] : memref<32x128xbf16, #tpu.memory_space<vmem>>, vector<16x128xbf16>
    %c2_43 = arith.constant 2 : index
    %c0_44 = arith.constant 0 : index
    %c0_45 = arith.constant 0 : index
    %77 = vector.load %arg7[%c2_43, %c0_44, %c0_45] : memref<3x128x128xbf16, #tpu.memory_space<vmem>>, vector<1x128x128xbf16>
    %78 = vector.shape_cast %77 : vector<1x128x128xbf16> to vector<128x128xbf16>
    %cst_46 = arith.constant dense<0.000000e+00> : vector<16x128xf32>
    %79 = tpu.matmul %76, %78, %cst_46 {dimension_numbers = #tpu.dot_dimension_numbers<[1], [0], [0], [1], [0, 0, 1, 1], [], []>} : vector<16x128xbf16>, vector<128x128xbf16>, vector<16x128xf32> -> vector<16x128xf32>
    %80 = arith.addf %75, %79 : vector<16x128xf32>
    %c0_47 = arith.constant 0 : index
    %c0_48 = arith.constant 0 : index
    %81 = vector.load %arg8[%c0_47, %c0_48] : memref<1x128xf32, #tpu.memory_space<vmem>>, vector<1x128xf32>
    %82 = vector.broadcast %81 : vector<1x128xf32> to vector<16x128xf32>
    %83 = arith.addf %80, %82 : vector<16x128xf32>
    %c0_49 = arith.constant 0 : index
    %c0_50 = arith.constant 0 : index
    %c0_51 = arith.constant 0 : index
    %84 = vector.load %arg9[%c0_49, %c0_50, %c0_51] : memref<1x16x128xf32, #tpu.memory_space<vmem>>, vector<1x16x128xf32>
    %85 = vector.shape_cast %84 : vector<1x16x128xf32> to vector<16x128xf32>
    %86 = vector.shape_cast %83 : vector<16x128xf32> to vector<1x16x128xf32>
    tpu.vector_store %arg9[%c0_49, %c0_50, %c0_51], %86 {strides = array<i32>} : memref<1x16x128xf32, #tpu.memory_space<vmem>>, vector<1x16x128xf32>,
    return
  }
  func.func @transform_0(%arg0: i32, %arg1: i32) -> (i32, i32, i32) {
    %c1_i32 = arith.constant 1 : i32
    %0 = arith.muli %arg1, %c1_i32 : i32
    %c1_i32_0 = arith.constant 1 : i32
    %1 = arith.subi %0, %c1_i32_0 : i32
    %c0_i32 = arith.constant 0 : i32
    %2 = arith.maxsi %1, %c0_i32 : i32
    %c0_i32_1 = arith.constant 0 : i32
    %c0_i32_2 = arith.constant 0 : i32
    return %arg0, %2, %c0_i32_1 : i32, i32, i32
  }
  func.func @transform_1(%arg0: i32, %arg1: i32) -> (i32, i32, i32) {
    %c0_i32 = arith.constant 0 : i32
    %c0_i32_0 = arith.constant 0 : i32
    return %arg0, %arg1, %c0_i32 : i32, i32, i32
  }
  func.func @transform_2(%arg0: i32, %arg1: i32) -> (i32, i32, i32) {
    %c1_i32 = arith.constant 1 : i32
    %0 = arith.addi %arg1, %c1_i32 : i32
    %c1_i32_0 = arith.constant 1 : i32
    %1 = arith.muli %0, %c1_i32_0 : i32
    %c2_i32 = arith.constant 2 : i32
    %2 = arith.minsi %1, %c2_i32 : i32
    %c0_i32 = arith.constant 0 : i32
    %c0_i32_1 = arith.constant 0 : i32
    return %arg0, %2, %c0_i32 : i32, i32, i32
  }
  func.func @transform_3(%arg0: i32, %arg1: i32) -> (i32, i32, i32) {
    %c0_i32 = arith.constant 0 : i32
    %c0_i32_0 = arith.constant 0 : i32
    %c0_i32_1 = arith.constant 0 : i32
    %c0_i32_2 = arith.constant 0 : i32
    return %c0_i32, %c0_i32_0, %c0_i32_1 : i32, i32, i32
  }
  func.func @transform_4(%arg0: i32, %arg1: i32) -> (i32, i32) {
    %c0_i32 = arith.constant 0 : i32
    %c0_i32_0 = arith.constant 0 : i32
    %c0_i32_1 = arith.constant 0 : i32
    return %c0_i32, %c0_i32_0 : i32, i32
  }
  func.func @transform_5(%arg0: i32, %arg1: i32) -> (i32, i32, i32) {
    %c0_i32 = arith.constant 0 : i32
    %c0_i32_0 = arith.constant 0 : i32
    %c0_i32_1 = arith.constant 0 : i32
    %c0_i32_2 = arith.constant 0 : i32
    return %c0_i32, %c0_i32_0, %c0_i32_1 : i32, i32, i32
  }
  func.func @transform_6(%arg0: i32, %arg1: i32) -> (i32, i32) {
    %c0_i32 = arith.constant 0 : i32
    %c0_i32_0 = arith.constant 0 : i32
    %c0_i32_1 = arith.constant 0 : i32
    return %c0_i32, %c0_i32_0 : i32, i32
  }
  func.func @transform_7(%arg0: i32, %arg1: i32) -> (i32, i32, i32) {
    %c0_i32 = arith.constant 0 : i32
    %c0_i32_0 = arith.constant 0 : i32
    return %arg0, %arg1, %c0_i32 : i32, i32, i32
  }
}

</mosaic_0001>

<llo_original>
// kernel: tpu_custom_call.1
$region0: #{tpu_custom_call.1}
  #allocation0 [shape = 'u32[]', space=smem, size = 0x4, offset = 0x4, fixed_abs, tag = 'smem constant byte address 0x4 - core index']
  #allocation1 [shape = 'u32[144,128]{1,0:T(1,128)}', space=vmem, size = 0x12000, scoped, tag = 'internal scratch']
  #allocation2 [shape = 'bf16[32,128]{1,0:T(16,128)(2,1)}', space=vmem, size = 0x2000, scoped, tag = 'scratch operand']
  %s0 = inlined_call_operand.vmem [shape: bf16[2,48,32], index: 0, kind: input, shape index: {}]
  %s1 = inlined_call_operand.vmem [shape: bf16[2,48,32], index: 1, kind: input, shape index: {}]
  %s2 = inlined_call_operand.vmem [shape: bf16[2,48,32], index: 2, kind: input, shape index: {}]
  %s3 = inlined_call_operand.vmem [shape: bf16[3,32,128], index: 3, kind: input, shape index: {}]
  %s4 = inlined_call_operand.vmem [shape: f32[1,128], index: 4, kind: input, shape index: {}]
  %s5 = inlined_call_operand.vmem [shape: bf16[3,128,128], index: 5, kind: input, shape index: {}]
  %s6 = inlined_call_operand.vmem [shape: f32[1,128], index: 6, kind: input, shape index: {}]
  %s7 = inlined_call_operand.hbm [shape: f32[2,48,128], index: 7, kind: output, shape index: {}]
  %s8 = sld [smem:[#allocation0]]
  $region61: #{tpu_custom_call.1} parent=0
    _
  %s10 = ssub.s32 1, %s8
  %s11 = scalar_select 0, %s10, %s8
  $region1: #{tpu_custom_call.1} parent=0
    #allocation3 [shape = 'u8[16384]{0}', space=vmem, size = 0x4000, scoped, tag = 'output window, operand 0']
    #allocation4 [shape = 's32[2]{0}', space=sflag, size = 0x8, scoped, tag = 'scoped memory for tpu_custom_call.1']
    %12 = vsyncpa [#allocation4], 0
    %s13 = scalar_lea.sflag [#allocation4], 1
    %14 = vsyncpa %s13, 0
    loop: start=0, step=1, limit=8
    $region2: #{tpu_custom_call.1} parent=1 // loop_pre_header
      _
    $region3: #{tpu_custom_call.1} parent=1 // loop_header
      %s16 = sphi 0, %s20
      %p17 = scmp.ge.s32.totalorder %s16, 8
      %s23 = sphi 0, %s35
      %s24 = sphi 0, %s31
      %s25 = sphi 0, %s23
      %s26 = sphi 0, %s24
      %s27 = sphi 0, %s25
      %s28 = sphi 0, %s26
      %s46 = sphi 0, %s48
      %s49 = sphi 0, %s46
      %s50 = sphi 0, %s49
      %s66 = sphi 0, %s50
      %s74 = sphi 0, %s76
      %s77 = sphi 0, %s74
      %s78 = sphi 0, %s77
      %s94 = sphi 0, %s78
      %s108 = sphi 0, %s110
      %s111 = sphi 0, %s108
      %s112 = sphi 0, %s111
      %s128 = sphi 0, %s112
      %s132 = sphi 0, %s132
      %s134 = sphi 0, %s132
      %s135 = sphi 0, %s134
      %s149 = sphi 0, %s135
      %s153 = sphi 0, %s153
      %s155 = sphi 0, %s153
      %s156 = sphi 0, %s155
      %s170 = sphi 0, %s156
      %s174 = sphi 0, %s174
      %s176 = sphi 0, %s174
      %s177 = sphi 0, %s176
      %s191 = sphi 0, %s177
      %s195 = sphi 0, %s195
      %s197 = sphi 0, %s195
      %s198 = sphi 0, %s197
      %s212 = sphi 0, %s198
      %s220 = sphi 0, %s222
      %s223 = sphi 0, %s220
      %s224 = sphi 0, %s223
      %s240 = sphi 0, %s224
    $region4: #{tpu_custom_call.1} parent=1 // loop_header_branch
      %19 = sbr.rel (%p17) target = $region8
    $region5: #{tpu_custom_call.1} parent=1 // loop_body
      %s21 = ssub.s32 %s16, 1
      %s22 = ssub.s32 %s16, 2
      %s29 = sadd.s32 1, %s24
      %p30 = scmp.ge.s32.totalorder %s29, 3
      %s31 = scalar_select %p30, 0, %s29
      %s32 = sadd.s32 1, %s23
      %s33 = scalar_select %p30, %s32, %s23
      %p34 = scmp.ge.s32.totalorder %s33, 2
      %s35 = scalar_select %p34, 0, %s33
      %s36 = ssub.s32 %s24, 1
      %p37 = scmp.gt.s32.totalorder %s36, 0
      %s38 = scalar_select %p37, %s36, 0
      %s39 = ssub.s32 %s31, 1
      %p40 = scmp.gt.s32.totalorder %s39, 0
      %s41 = scalar_select %p40, %s39, 0
      %s42 = ssub.s32 %s23, %s35
      %s43 = ssub.s32 %s38, %s41
      %s44 = sor.u32 %s42, %s43
      %p45 = scmp.eq.s32.totalorder %s44, 0
      %s47 = sadd.s32 %s46, 1
      %s48 = scalar_select %p45, %s46, %s47
      %p51 = pneg %p45
      %p52 = scmp.eq.s32.totalorder %s16, 5
      %p53 = por %p51, %p52
      %p54 = scmp.ne.s32.totalorder %s46, %s49
      %p55 = scmp.eq.s32.totalorder %s16, 0
      %p56 = por %p54, %p55
      %p57 = scmp.ne.s32.totalorder %s46, %s49
      %p58 = scmp.eq.s32.totalorder %s21, 5
      %p59 = por %p57, %p58
      %p60 = scmp.ne.s32.totalorder %s49, %s50
      %p61 = scmp.eq.s32.totalorder %s21, 0
      %p62 = por %p60, %p61
      %p63 = scmp.ne.s32.totalorder %s49, %s50
      %p64 = scmp.eq.s32.totalorder %s22, 5
      %p65 = por %p63, %p64
      %p67 = scmp.ne.s32.totalorder %s50, %s66
      %p68 = scmp.eq.s32.totalorder %s22, 0
      %p69 = por %p67, %p68
      %s70 = ssub.s32 %s23, %s35
      %s71 = ssub.s32 %s24, %s31
      %s72 = sor.u32 %s70, %s71
      %p73 = scmp.eq.s32.totalorder %s72, 0
      %s75 = sadd.s32 %s74, 1
      %s76 = scalar_select %p73, %s74, %s75
      %p79 = pneg %p73
      %p80 = scmp.eq.s32.totalorder %s16, 5
      %p81 = por %p79, %p80
      %p82 = scmp.ne.s32.totalorder %s74, %s77
      %p83 = scmp.eq.s32.totalorder %s16, 0
      %p84 = por %p82, %p83
      %p85 = scmp.ne.s32.totalorder %s74, %s77
      %p86 = scmp.eq.s32.totalorder %s21, 5
      %p87 = por %p85, %p86
      %p88 = scmp.ne.s32.totalorder %s77, %s78
      %p89 = scmp.eq.s32.totalorder %s21, 0
      %p90 = por %p88, %p89
      %p91 = scmp.ne.s32.totalorder %s77, %s78
      %p92 = scmp.eq.s32.totalorder %s22, 5
      %p93 = por %p91, %p92
      %p95 = scmp.ne.s32.totalorder %s78, %s94
      %p96 = scmp.eq.s32.totalorder %s22, 0
      %p97 = por %p95, %p96
      %s98 = sadd.s32 %s24, 1
      %p99 = scmp.lt.s32.totalorder %s98, 2
      %s100 = scalar_select %p99, %s98, 2
      %s101 = sadd.s32 %s31, 1
      %p102 = scmp.lt.s32.totalorder %s101, 2
      %s103 = scalar_select %p102, %s101, 2
      %s104 = ssub.s32 %s23, %s35
      %s105 = ssub.s32 %s100, %s103
      %s106 = sor.u32 %s104, %s105
      %p107 = scmp.eq.s32.totalorder %s106, 0
      %s109 = sadd.s32 %s108, 1
      %s110 = scalar_select %p107, %s108, %s109
      %p113 = pneg %p107
      %p114 = scmp.eq.s32.totalorder %s16, 5
      %p115 = por %p113, %p114
      %p116 = scmp.ne.s32.totalorder %s108, %s111
      %p117 = scmp.eq.s32.totalorder %s16, 0
      %p118 = por %p116, %p117
      %p119 = scmp.ne.s32.totalorder %s108, %s111
      %p120 = scmp.eq.s32.totalorder %s21, 5
      %p121 = por %p119, %p120
      %p122 = scmp.ne.s32.totalorder %s111, %s112
      %p123 = scmp.eq.s32.totalorder %s21, 0
      %p124 = por %p122, %p123
      %p125 = scmp.ne.s32.totalorder %s111, %s112
      %p126 = scmp.eq.s32.totalorder %s22, 5
      %p127 = por %p125, %p126
      %p129 = scmp.ne.s32.totalorder %s112, %s128
      %p130 = scmp.eq.s32.totalorder %s22, 0
      %p131 = por %p129, %p130
      %s133 = sadd.s32 %s132, 1
      %p136 = scmp.eq.s32.totalorder %s16, 5
      %p137 = scmp.ne.s32.totalorder %s132, %s134
      %p138 = scmp.eq.s32.totalorder %s16, 0
      %p139 = por %p137, %p138
      %p140 = scmp.ne.s32.totalorder %s132, %s134
      %p141 = scmp.eq.s32.totalorder %s21, 5
      %p142 = por %p140, %p141
      %p143 = scmp.ne.s32.totalorder %s134, %s135
      %p144 = scmp.eq.s32.totalorder %s21, 0
      %p145 = por %p143, %p144
      %p146 = scmp.ne.s32.totalorder %s134, %s135
      %p147 = scmp.eq.s32.totalorder %s22, 5
      %p148 = por %p146, %p147
      %p150 = scmp.ne.s32.totalorder %s135, %s149
      %p151 = scmp.eq.s32.totalorder %s22, 0
      %p152 = por %p150, %p151
      %s154 = sadd.s32 %s153, 1
      %p157 = scmp.eq.s32.totalorder %s16, 5
      %p158 = scmp.ne.s32.totalorder %s153, %s155
      %p159 = scmp.eq.s32.totalorder %s16, 0
      %p160 = por %p158, %p159
      %p161 = scmp.ne.s32.totalorder %s153, %s155
      %p162 = scmp.eq.s32.totalorder %s21, 5
      %p163 = por %p161, %p162
      %p164 = scmp.ne.s32.totalorder %s155, %s156
      %p165 = scmp.eq.s32.totalorder %s21, 0
      %p166 = por %p164, %p165
      %p167 = scmp.ne.s32.totalorder %s155, %s156
      %p168 = scmp.eq.s32.totalorder %s22, 5
      %p169 = por %p167, %p168
      %p171 = scmp.ne.s32.totalorder %s156, %s170
      %p172 = scmp.eq.s32.totalorder %s22, 0
      %p173 = por %p171, %p172
      %s175 = sadd.s32 %s174, 1
      %p178 = scmp.eq.s32.totalorder %s16, 5
      %p179 = scmp.ne.s32.totalorder %s174, %s176
      %p180 = scmp.eq.s32.totalorder %s16, 0
      %p181 = por %p179, %p180
      %p182 = scmp.ne.s32.totalorder %s174, %s176
      %p183 = scmp.eq.s32.totalorder %s21, 5
      %p184 = por %p182, %p183
      %p185 = scmp.ne.s32.totalorder %s176, %s177
      %p186 = scmp.eq.s32.totalorder %s21, 0
      %p187 = por %p185, %p186
      %p188 = scmp.ne.s32.totalorder %s176, %s177
      %p189 = scmp.eq.s32.totalorder %s22, 5
      %p190 = por %p188, %p189
      %p192 = scmp.ne.s32.totalorder %s177, %s191
      %p193 = scmp.eq.s32.totalorder %s22, 0
      %p194 = por %p192, %p193
      %s196 = sadd.s32 %s195, 1
      %p199 = scmp.eq.s32.totalorder %s16, 5
      %p200 = scmp.ne.s32.totalorder %s195, %s197
      %p201 = scmp.eq.s32.totalorder %s16, 0
      %p202 = por %p200, %p201
      %p203 = scmp.ne.s32.totalorder %s195, %s197
      %p204 = scmp.eq.s32.totalorder %s21, 5
      %p205 = por %p203, %p204
      %p206 = scmp.ne.s32.totalorder %s197, %s198
      %p207 = scmp.eq.s32.totalorder %s21, 0
      %p208 = por %p206, %p207
      %p209 = scmp.ne.s32.totalorder %s197, %s198
      %p210 = scmp.eq.s32.totalorder %s22, 5
      %p211 = por %p209, %p210
      %p213 = scmp.ne.s32.totalorder %s198, %s212
      %p214 = scmp.eq.s32.totalorder %s22, 0
      %p215 = por %p213, %p214
      %s216 = ssub.s32 %s23, %s35
      %s217 = ssub.s32 %s24, %s31
      %s218 = sor.u32 %s216, %s217
      %p219 = scmp.eq.s32.totalorder %s218, 0
      %s221 = sadd.s32 %s220, 1
      %s222 = scalar_select %p219, %s220, %s221
      %p225 = pneg %p219
      %p226 = scmp.eq.s32.totalorder %s16, 5
      %p227 = por %p225, %p226
      %p228 = scmp.ne.s32.totalorder %s220, %s223
      %p229 = scmp.eq.s32.totalorder %s16, 0
      %p230 = por %p228, %p229
      %p231 = scmp.ne.s32.totalorder %s220, %s223
      %p232 = scmp.eq.s32.totalorder %s21, 5
      %p233 = por %p231, %p232
      %p234 = scmp.ne.s32.totalorder %s223, %s224
      %p235 = scmp.eq.s32.totalorder %s21, 0
      %p236 = por %p234, %p235
      %p237 = scmp.ne.s32.totalorder %s223, %s224
      %p238 = scmp.eq.s32.totalorder %s22, 5
      %p239 = por %p237, %p238
      %p241 = scmp.ne.s32.totalorder %s224, %s240
      %p242 = scmp.eq.s32.totalorder %s22, 0
      %p243 = por %p241, %p242
      %p244 = scmp.le.s32.totalorder 1, %s16
      %p245 = scmp.lt.s32.totalorder %s16, 7
      %p246 = pnand %p244, %p245
      %p247 = pneg %p246
      // Predicated region
      $region9: #{tpu_custom_call.1} parent=5 // pred_check
        _
      $region10: #{tpu_custom_call.1} parent=5 // pred_check_branch
        %249 = sbr.rel (%p246) target = $region12
      $region11: #{tpu_custom_call.1} parent=5 // pred_region
        %s250 = ssub.s32 %s16, 1
        // Predicated region
        $region13: #{tpu_custom_call.1} parent=11 // pred_check
          %p251 = pneg %p145
        $region14: #{tpu_custom_call.1} parent=11 // pred_check_branch
          %253 = sbr.rel (%p251) target = $region16
        $region15: #{tpu_custom_call.1} parent=11 // pred_region
          _
        $region16: #{tpu_custom_call.1} parent=11 // pred_fallthru
          _
        // Predicated region
        $region17: #{tpu_custom_call.1} parent=11 // pred_check
          %p254 = pneg %p166
        $region18: #{tpu_custom_call.1} parent=11 // pred_check_branch
          %256 = sbr.rel (%p254) target = $region20
        $region19: #{tpu_custom_call.1} parent=11 // pred_region
          _
        $region20: #{tpu_custom_call.1} parent=11 // pred_fallthru
          _
        // Predicated region
        $region21: #{tpu_custom_call.1} parent=11 // pred_check
          %p257 = pneg %p187
        $region22: #{tpu_custom_call.1} parent=11 // pred_check_branch
          %259 = sbr.rel (%p257) target = $region24
        $region23: #{tpu_custom_call.1} parent=11 // pred_region
          _
        $region24: #{tpu_custom_call.1} parent=11 // pred_fallthru
          _
        // Predicated region
        $region25: #{tpu_custom_call.1} parent=11 // pred_check
          %p260 = pneg %p208
        $region26: #{tpu_custom_call.1} parent=11 // pred_check_branch
          %262 = sbr.rel (%p260) target = $region28
        $region27: #{tpu_custom_call.1} parent=11 // pred_region
          _
        $region28: #{tpu_custom_call.1} parent=11 // pred_fallthru
          _
      $region12: #{tpu_custom_call.1} parent=5 // pred_fallthru
        _
      %p263 = scmp.lt.s32.totalorder %s16, 6
      // Predicated region
      $region29: #{tpu_custom_call.1} parent=5 // pred_check
        %p264 = pneg %p263
      $region30: #{tpu_custom_call.1} parent=5 // pred_check_branch
        %266 = sbr.rel (%p264) target = $region32
      $region31: #{tpu_custom_call.1} parent=5 // pred_region
        // Predicated region
        $region33: #{tpu_custom_call.1} parent=31 // pred_check
          %p267 = pneg %p56
        $region34: #{tpu_custom_call.1} parent=31 // pred_check_branch
          %269 = sbr.rel (%p267) target = $region36
        $region35: #{tpu_custom_call.1} parent=31 // pred_region
          %s270 = ssub.s32 %s24, 1
          %p271 = scmp.gt.s32.totalorder %s270, 0
          %s272 = scalar_select %p271, %s270, 0
          %s273 = smul.u32 2, %s272
          %p274 = scmp.lt.s32.totalorder %s23, 1
          %s275 = scalar_select %p274, %s23, 1
          %p276 = scmp.lt.s32.totalorder %s273, 5
          %s277 = scalar_select %p276, %s273, 5
          %s278 = smul.addr %s275, 6
          %s279 = sadd.s32 %s277, %s278
          %s280 = smul.addr %s279, 4
          %s281 = scalar_lea.vmem %s0, %s280
          %s282 = ssub.s32 %s24, 1
          %p283 = scmp.gt.s32.totalorder %s282, 0
          %s284 = scalar_select %p283, %s282, 0
          %s285 = smul.u32 2, %s284
        $region36: #{tpu_custom_call.1} parent=31 // pred_fallthru
          _
        // Predicated region
        $region37: #{tpu_custom_call.1} parent=31 // pred_check
          %p286 = pneg %p84
        $region38: #{tpu_custom_call.1} parent=31 // pred_check_branch
          %288 = sbr.rel (%p286) target = $region40
        $region39: #{tpu_custom_call.1} parent=31 // pred_region
          %s289 = smul.u32 2, %s24
          %p290 = scmp.lt.s32.totalorder %s23, 1
          %s291 = scalar_select %p290, %s23, 1
          %p292 = scmp.lt.s32.totalorder %s289, 5
          %s293 = scalar_select %p292, %s289, 5
          %s294 = smul.addr %s291, 6
          %s295 = sadd.s32 %s293, %s294
          %s296 = smul.addr %s295, 4
          %s297 = scalar_lea.vmem %s1, %s296
          %s298 = smul.u32 2, %s24
        $region40: #{tpu_custom_call.1} parent=31 // pred_fallthru
          _
        // Predicated region
        $region41: #{tpu_custom_call.1} parent=31 // pred_check
          %p299 = pneg %p118
        $region42: #{tpu_custom_call.1} parent=31 // pred_check_branch
          %301 = sbr.rel (%p299) target = $region44
        $region43: #{tpu_custom_call.1} parent=31 // pred_region
          %s302 = sadd.s32 %s24, 1
          %p303 = scmp.lt.s32.totalorder %s302, 2
          %s304 = scalar_select %p303, %s302, 2
          %s305 = smul.u32 2, %s304
          %p306 = scmp.lt.s32.totalorder %s23, 1
          %s307 = scalar_select %p306, %s23, 1
          %p308 = scmp.lt.s32.totalorder %s305, 5
          %s309 = scalar_select %p308, %s305, 5
          %s310 = smul.addr %s307, 6
          %s311 = sadd.s32 %s309, %s310
          %s312 = smul.addr %s311, 4
          %s313 = scalar_lea.vmem %s2, %s312
          %s314 = sadd.s32 %s24, 1
          %p315 = scmp.lt.s32.totalorder %s314, 2
          %s316 = scalar_select %p315, %s314, 2
          %s317 = smul.u32 2, %s316
        $region44: #{tpu_custom_call.1} parent=31 // pred_fallthru
          _
      $region32: #{tpu_custom_call.1} parent=5 // pred_fallthru
        _
      %p318 = scmp.le.s32.totalorder 1, %s16
      %p319 = scmp.lt.s32.totalorder %s16, 7
      %p320 = pnand %p318, %p319
      %p321 = pneg %p320
      // Predicated region
      $region45: #{tpu_custom_call.1} parent=5 // pred_check
        _
      $region46: #{tpu_custom_call.1} parent=5 // pred_check_branch
        %323 = sbr.rel (%p320) target = $region48
      $region47: #{tpu_custom_call.1} parent=5 // pred_region
        %s324 = ssub.s32 %s16, 1
        %s325 = ssub.s32 %s26, 1
        %p326 = scmp.gt.s32.totalorder %s325, 0
        %s327 = scalar_select %p326, %s325, 0
        %s328 = smul.u32 2, %s327
        %p329 = scmp.lt.s32.totalorder %s25, 1
        %s330 = scalar_select %p329, %s25, 1
        %p331 = scmp.lt.s32.totalorder %s328, 5
        %s332 = scalar_select %p331, %s328, 5
        %s333 = smul.addr %s330, 6
        %s334 = sadd.s32 %s332, %s333
        %s335 = smul.addr %s334, 4
        %s336 = scalar_lea.vmem %s0, %s335
        %p337 = pneg %p62
        %p338 = pneg %p59
        %s339 = smul.u32 2, %s26
        %p340 = scmp.lt.s32.totalorder %s25, 1
        %s341 = scalar_select %p340, %s25, 1
        %p342 = scmp.lt.s32.totalorder %s339, 5
        %s343 = scalar_select %p342, %s339, 5
        %s344 = smul.addr %s341, 6
        %s345 = sadd.s32 %s343, %s344
        %s346 = smul.addr %s345, 4
        %s347 = scalar_lea.vmem %s1, %s346
        %p348 = pneg %p90
        %p349 = pneg %p87
        %s350 = sadd.s32 %s26, 1
        %p351 = scmp.lt.s32.totalorder %s350, 2
        %s352 = scalar_select %p351, %s350, 2
        %s353 = smul.u32 2, %s352
        %p354 = scmp.lt.s32.totalorder %s25, 1
        %s355 = scalar_select %p354, %s25, 1
        %p356 = scmp.lt.s32.totalorder %s353, 5
        %s357 = scalar_select %p356, %s353, 5
        %s358 = smul.addr %s355, 6
        %s359 = sadd.s32 %s357, %s358
        %s360 = smul.addr %s359, 4
        %s361 = scalar_lea.vmem %s2, %s360
        %p362 = pneg %p124
        %p363 = pneg %p121
        %p364 = pneg %p145
        %p365 = pneg %p142
        %p366 = pneg %p166
        %p367 = pneg %p163
        %p368 = pneg %p187
        %p369 = pneg %p184
        %p370 = pneg %p208
        %p371 = pneg %p205
        %p372 = pneg %p236
        %p373 = pneg %p233
        %s374 = sand.u32 %s223, 1
        %s375 = scalar_lea.sflag [#allocation4], %s374
        %s376 = sand.u32 %s223, 1
        %s377 = smul.addr %s376, 16
        %s378 = scalar_lea.vmem [#allocation3], %s377
        %s379 = ssub.s32 %s26, 1
        %p380 = scmp.gt.s32.totalorder %s379, 0
        %s381 = scalar_select %p380, %s379, 0
        %s382 = smul.u32 2, %s381
        %p383 = scmp.lt.s32.totalorder %s25, 1
        %s384 = scalar_select %p383, %s25, 1
        %p385 = scmp.lt.s32.totalorder %s382, 5
        %s386 = scalar_select %p385, %s382, 5
        %s387 = smul.addr %s384, 6
        %s388 = sadd.s32 %s386, %s387
        %s389 = smul.addr %s388, 4
        %s390 = scalar_lea.vmem %s0, %s389
        %s391 = ssub.s32 %s26, 1
        %p392 = scmp.gt.s32.totalorder %s391, 0
        %s393 = scalar_select %p392, %s391, 0
        %s394 = smul.u32 2, %s393
        %s395 = smul.u32 2, %s26
        %p396 = scmp.lt.s32.totalorder %s25, 1
        %s397 = scalar_select %p396, %s25, 1
        %p398 = scmp.lt.s32.totalorder %s395, 5
        %s399 = scalar_select %p398, %s395, 5
        %s400 = smul.addr %s397, 6
        %s401 = sadd.s32 %s399, %s400
        %s402 = smul.addr %s401, 4
        %s403 = scalar_lea.vmem %s1, %s402
        %s404 = smul.u32 2, %s26
        %s405 = sadd.s32 %s26, 1
        %p406 = scmp.lt.s32.totalorder %s405, 2
        %s407 = scalar_select %p406, %s405, 2
        %s408 = smul.u32 2, %s407
        %p409 = scmp.lt.s32.totalorder %s25, 1
        %s410 = scalar_select %p409, %s25, 1
        %p411 = scmp.lt.s32.totalorder %s408, 5
        %s412 = scalar_select %p411, %s408, 5
        %s413 = smul.addr %s410, 6
        %s414 = sadd.s32 %s412, %s413
        %s415 = smul.addr %s414, 4
        %s416 = scalar_lea.vmem %s2, %s415
        %s417 = sadd.s32 %s26, 1
        %p418 = scmp.lt.s32.totalorder %s417, 2
        %s419 = scalar_select %p418, %s417, 2
        %s420 = smul.u32 2, %s419
        %s421 = smul.u32 2, %s26
        %s425 = smul.u32 %s26, 16
        %v426 = vld [vmem:[%s403] sm:$0xf]
        %v427 = vld [vmem:[%s403 + $0x4] sm:$0xf]
        %v428 = vld [vmem:[%s390 + $0x4] sm:$0xf]
        %v429 = vld [vmem:[%s416] sm:$0xf]
        %s430 = ssub.s32 %s425, 2
        %v431 = vlaneseq
        %v432 = vshrl.u32 %v431, 7
        %v433 = vstv %s430
        %v434 = vadd.s32 %v433, %v432
        %s435 = sadd.s32 %s425, 16
        %v436 = vstv %s435
        %v437 = vadd.s32 %v436, %v432
        %vm438 = vcmp.ge.s32.totalorder %v434, 0
        %vm439 = vcmp.lt.s32.totalorder %v434, 40
        %vm440 = vmand %vm438, %vm439
        %v441 = vsel %vm440, 1, 0
        %vm442 = vcmp.eq.s32.totalorder %v441, 1
        %vm443 = vmpackc.low %vm442, %vm442
        %v444 = vsel %vm443, 65537, 0
        %v445 = vrot.slane %v444, 5
        %vm446 = vcmp.ne.s16.totalorder %v445, 0
        %v447 = vsel %vm446, %v428, 0
        %vm448 = vcmp.lt.s32.totalorder %v437, 40
        %v449 = vsel %vm448, 1, 0
        %vm450 = vcmp.eq.s32.totalorder %v449, 1
        %vm451 = vmpackc.low %vm450, %vm450
        %v452 = vsel %vm451, %v429, 0
        %v454 = vunpack.c.l.b16 %v447
        %v455 = vpack.c.b16 %v454, %v454
        %v456 = vrot.slane %v455, 3
        %v459 = vunpack.c.l.b16 %v426
        %v460 = vunpack.c.l.b16 %v427
        %v461 = vpack.c.b16 %v460, %v459
        %v462 = vrot.slane %v461, 7
        %v464 = vunpack.c.l.b16 %v452
        %v465 = vpack.c.b16 %v464, %v464
        %v466 = vrot.slane %v465, 7
        %vm467 = vcmask 1040384
        %v470 = vsel %vm467, %v456, %v462
        %v472 = vsel %vm467, %v462, %v466
        %v473 = vld [vmem:[%s3] sm:$0xf]
        %v474 = vld [vmem:[%s3 + $0x4] sm:$0xf]
        %v475 = vld [vmem:[%s3 + $0x8] sm:$0xf]
        %v476 = vld [vmem:[%s3 + $0xc] sm:$0xf]
        %s477 = scalar_lea.vmem %s3, 16
        %v478 = vld [vmem:[%s477] sm:$0xf]
        %v479 = vld [vmem:[%s477 + $0x4] sm:$0xf]
        %v480 = vld [vmem:[%s477 + $0x8] sm:$0xf]
        %v481 = vld [vmem:[%s477 + $0xc] sm:$0xf]
        %vm482 = vsmask.f32 7424
        %v483 = vshrl.u32 %v470, 16
        %v485 = vshll.u32 %v470, 16
        %v487 = vrot.slane %v485, 1
        %v488 = vor.u32 %v483, %v487
        %v489 = vshll.u32 %v472, 16
        %v491 = vrot.slane %v489, 1
        %v492 = vsel %vm482, %v488, %v491
        %v493 = vshrl.u32 %v472, 16
        %v495 = vor.u32 %v493, %v491
        %v500 = vunpack.c.l.b16 %v478
        %v501 = vunpack.c.l.b16 %v479
        %v502 = vunpack.c.l.b16 %v480
        %v503 = vunpack.c.l.b16 %v481
        %v504 = vpack.c.b16 %v501, %v500
        %v505 = vpack.c.b16 %v503, %v502
        %vm508 = vcmask 261120
        %v510 = vsel %vm508, %v492, 0
        %v513 = vsel %vm508, %v495, 0
        %515 = vmatprep.subr.bf16.mxu0 0
        %516 = vmatpush1.bf16.msra.mxu0 %v504
        %517 = vmatprep.subr.bf16.mxu0 0
        %518 = vmatpush1.bf16.msra.mxu0 %v505
        %519 = vmatprep.subr.bf16.mxu0 0
        %520 = vmatpush1.bf16.msra.mxu0 0
        %521 = vmatprep.subr.bf16.mxu0 0
        %522 = vmatpush1.bf16.msra.mxu0 0
        %523 = vmatprep.subr.bf16.mxu0 0
        %524 = vmatpush1.bf16.msra.mxu0 0
        %525 = vmatprep.subr.bf16.mxu0 0
        %526 = vmatpush1.bf16.msra.mxu0 0
        %527 = vmatprep.subr.bf16.mxu0 0
        %528 = vmatpush1.bf16.msra.mxu0 0
        %529 = vmatprep.subr.bf16.mxu0 0
        %530 = vmatpush1.bf16.msra.mxu0 0
        %531 = vmatprep.subr.bf16.mxu0 0
        %532 = vmatpush1.bf16.msra.mxu0 0
        %533 = vmatprep.subr.bf16.mxu0 0
        %534 = vmatpush1.bf16.msra.mxu0 0
        %535 = vmatprep.subr.bf16.mxu0 0
        %536 = vmatpush1.bf16.msra.mxu0 0
        %537 = vmatprep.subr.bf16.mxu0 0
        %538 = vmatpush1.bf16.msra.mxu0 0
        %539 = vmatprep.subr.bf16.mxu0 0
        %540 = vmatpush1.bf16.msra.mxu0 0
        %541 = vmatprep.subr.bf16.mxu0 0
        %542 = vmatpush1.bf16.msra.mxu0 0
        %543 = vmatprep.subr.bf16.mxu0 0
        %544 = vmatpush1.bf16.msra.mxu0 0
        %545 = vmatprep.subr.bf16.mxu0 0
        %546 = vmatpush1.bf16.msra.mxu0 0
        %547 = vmatprep.mubr.bf16.mxu0 0
        %548 = vmatmul.mubr.bf16.gmra.mrb[0].mxu0 %v510
        %v549 = vpop.f32.mrb[0].mxu0
        %v550 = vadd.f32 0.0, %v549
        %v551 = vpop.f32.mrb[0].mxu0
        %v552 = vpop.f32.mrb[0].mxu0
        %v553 = vadd.f32 0.0, %v552
        %v554 = vpop.f32.mrb[0].mxu0
        %555 = vmatprep.mubr.bf16.mxu0 0
        %556 = vmatmul.mubr.bf16.gmra.mrb[0].mxu0 %v513
        %v557 = vpop.f32.mrb[0].mxu0
        %v558 = vadd.f32 0.0, %v557
        %v559 = vpop.f32.mrb[0].mxu0
        %v560 = vpop.f32.mrb[0].mxu0
        %v561 = vpop.f32.mrb[0].mxu0
        %562 = vdwg.mxu0
        %v567 = vunpack.c.l.b16 %v473
        %v568 = vunpack.c.l.b16 %v474
        %v569 = vunpack.c.l.b16 %v475
        %v570 = vunpack.c.l.b16 %v476
        %v571 = vpack.c.b16 %v568, %v567
        %v572 = vpack.c.b16 %v570, %v569
        %v575 = vsel %vm508, %v470, 0
        %v577 = vsel %vm508, %v472, 0
        %579 = vmatprep.subr.bf16.mxu0 0
        %580 = vmatpush1.bf16.msra.mxu0 %v571
        %581 = vmatprep.subr.bf16.mxu0 0
        %582 = vmatpush1.bf16.msra.mxu0 %v572
        %583 = vmatprep.subr.bf16.mxu0 0
        %584 = vmatpush1.bf16.msra.mxu0 0
        %585 = vmatprep.subr.bf16.mxu0 0
        %586 = vmatpush1.bf16.msra.mxu0 0
        %587 = vmatprep.subr.bf16.mxu0 0
        %588 = vmatpush1.bf16.msra.mxu0 0
        %589 = vmatprep.subr.bf16.mxu0 0
        %590 = vmatpush1.bf16.msra.mxu0 0
        %591 = vmatprep.subr.bf16.mxu0 0
        %592 = vmatpush1.bf16.msra.mxu0 0
        %593 = vmatprep.subr.bf16.mxu0 0
        %594 = vmatpush1.bf16.msra.mxu0 0
        %595 = vmatprep.subr.bf16.mxu0 0
        %596 = vmatpush1.bf16.msra.mxu0 0
        %597 = vmatprep.subr.bf16.mxu0 0
        %598 = vmatpush1.bf16.msra.mxu0 0
        %599 = vmatprep.subr.bf16.mxu0 0
        %600 = vmatpush1.bf16.msra.mxu0 0
        %601 = vmatprep.subr.bf16.mxu0 0
        %602 = vmatpush1.bf16.msra.mxu0 0
        %603 = vmatprep.subr.bf16.mxu0 0
        %604 = vmatpush1.bf16.msra.mxu0 0
        %605 = vmatprep.subr.bf16.mxu0 0
        %606 = vmatpush1.bf16.msra.mxu0 0
        %607 = vmatprep.subr.bf16.mxu0 0
        %608 = vmatpush1.bf16.msra.mxu0 0
        %609 = vmatprep.subr.bf16.mxu0 0
        %610 = vmatpush1.bf16.msra.mxu0 0
        %611 = vmatprep.mubr.bf16.mxu0 0
        %612 = vmatmul.mubr.bf16.gmra.mrb[0].mxu0 %v575
        %v613 = vpop.f32.mrb[0].mxu0
        %v614 = vadd.f32 %v550, %v613
        %v615 = vpop.f32.mrb[0].mxu0
        %v616 = vpop.f32.mrb[0].mxu0
        %v617 = vadd.f32 %v553, %v616
        %v618 = vpop.f32.mrb[0].mxu0
        %619 = vmatprep.mubr.bf16.mxu0 0
        %620 = vmatmul.mubr.bf16.gmra.mrb[0].mxu0 %v577
        %v621 = vpop.f32.mrb[0].mxu0
        %v622 = vadd.f32 %v558, %v621
        %v623 = vpop.f32.mrb[0].mxu0
        %v624 = vpop.f32.mrb[0].mxu0
        %v625 = vpop.f32.mrb[0].mxu0
        %626 = vdwg.mxu0
        %s627 = scalar_lea.vmem %s3, 32
        %v628 = vld [vmem:[%s627] sm:$0xf]
        %v629 = vld [vmem:[%s627 + $0x4] sm:$0xf]
        %v630 = vld [vmem:[%s627 + $0x8] sm:$0xf]
        %v631 = vld [vmem:[%s627 + $0xc] sm:$0xf]
        %vm634 = vcmask 1046528
        %v635 = vrot.slane %v470, 1
        %v636 = vrot.slane %v472, 1
        %v637 = vsel %vm634, %v635, %v636
        %v642 = vunpack.c.l.b16 %v628
        %v643 = vunpack.c.l.b16 %v629
        %v644 = vunpack.c.l.b16 %v630
        %v645 = vunpack.c.l.b16 %v631
        %v646 = vpack.c.b16 %v643, %v642
        %v647 = vpack.c.b16 %v645, %v644
        %v651 = vsel %vm508, %v637, 0
        %v654 = vsel %vm508, %v636, 0
        %656 = vmatprep.subr.bf16.mxu0 0
        %657 = vmatpush1.bf16.msra.mxu0 %v646
        %658 = vmatprep.subr.bf16.mxu0 0
        %659 = vmatpush1.bf16.msra.mxu0 %v647
        %660 = vmatprep.subr.bf16.mxu0 0
        %661 = vmatpush1.bf16.msra.mxu0 0
        %662 = vmatprep.subr.bf16.mxu0 0
        %663 = vmatpush1.bf16.msra.mxu0 0
        %664 = vmatprep.subr.bf16.mxu0 0
        %665 = vmatpush1.bf16.msra.mxu0 0
        %666 = vmatprep.subr.bf16.mxu0 0
        %667 = vmatpush1.bf16.msra.mxu0 0
        %668 = vmatprep.subr.bf16.mxu0 0
        %669 = vmatpush1.bf16.msra.mxu0 0
        %670 = vmatprep.subr.bf16.mxu0 0
        %671 = vmatpush1.bf16.msra.mxu0 0
        %672 = vmatprep.subr.bf16.mxu0 0
        %673 = vmatpush1.bf16.msra.mxu0 0
        %674 = vmatprep.subr.bf16.mxu0 0
        %675 = vmatpush1.bf16.msra.mxu0 0
        %676 = vmatprep.subr.bf16.mxu0 0
        %677 = vmatpush1.bf16.msra.mxu0 0
        %678 = vmatprep.subr.bf16.mxu0 0
        %679 = vmatpush1.bf16.msra.mxu0 0
        %680 = vmatprep.subr.bf16.mxu0 0
        %681 = vmatpush1.bf16.msra.mxu0 0
        %682 = vmatprep.subr.bf16.mxu0 0
        %683 = vmatpush1.bf16.msra.mxu0 0
        %684 = vmatprep.subr.bf16.mxu0 0
        %685 = vmatpush1.bf16.msra.mxu0 0
        %686 = vmatprep.subr.bf16.mxu0 0
        %687 = vmatpush1.bf16.msra.mxu0 0
        %688 = vmatprep.mubr.bf16.mxu0 0
        %689 = vmatmul.mubr.bf16.gmra.mrb[0].mxu0 %v651
        %v690 = vpop.f32.mrb[0].mxu0
        %v691 = vadd.f32 0.0, %v690
        %v692 = vpop.f32.mrb[0].mxu0
        %v693 = vpop.f32.mrb[0].mxu0
        %v694 = vadd.f32 0.0, %v693
        %v695 = vpop.f32.mrb[0].mxu0
        %696 = vmatprep.mubr.bf16.mxu0 0
        %697 = vmatmul.mubr.bf16.gmra.mrb[0].mxu0 %v654
        %v698 = vpop.f32.mrb[0].mxu0
        %v699 = vadd.f32 0.0, %v698
        %v700 = vpop.f32.mrb[0].mxu0
        %v701 = vpop.f32.mrb[0].mxu0
        %v702 = vpop.f32.mrb[0].mxu0
        %703 = vdwg.mxu0
        %v704 = vadd.f32 %v614, %v691
        %v705 = vadd.f32 %v617, %v694
        %v706 = vadd.f32 %v622, %v699
        %v707 = vld [vmem:[%s4] sm:$0x1]
        %v709 = vlaneseq
        %v710 = vshrl.u32 %v709, 7
        %v711 = vsub.s32 0, %v710
        %v712 = vrot.slane %v707, %v711
        %v714 = vadd.f32 %v704, %v712
        %v715 = vadd.f32 %v705, %v712
        %v716 = vadd.f32 %v706, %v712
        %s717 = ssub.s32 %s425, 1
        %v718 = vadd.s32 %v432, 8
        %v719 = vadd.s32 %v432, 16
        %v720 = vstv %s717
        %v721 = vadd.s32 %v720, %v432
        %v722 = vadd.s32 %v720, %v718
        %v723 = vadd.s32 %v720, %v719
        %vm724 = vcmp.ge.s32.totalorder %v721, 0
        %vm725 = vcmp.ge.s32.totalorder %v722, 0
        %vm726 = vcmp.ge.s32.totalorder %v723, 0
        %vm727 = vcmp.lt.s32.totalorder %v721, 40
        %vm728 = vcmp.lt.s32.totalorder %v722, 40
        %vm729 = vcmp.lt.s32.totalorder %v723, 40
        %vm730 = vmand %vm724, %vm727
        %vm731 = vmand %vm725, %vm728
        %vm732 = vmand %vm726, %vm729
        %vm733 = vcmp.gt.f32.partialorder %v714, 0.0
        %vm734 = vcmp.gt.f32.partialorder %v715, 0.0
        %vm735 = vcmp.gt.f32.partialorder %v716, 0.0
        %v736 = vsel %vm730, 1, 0
        %v737 = vsel %vm731, 1, 0
        %v738 = vsel %vm732, 1, 0
        %vm739 = vcmp.eq.s32.totalorder %v736, 1
        %vm740 = vcmp.eq.s32.totalorder %v737, 1
        %vm741 = vcmp.eq.s32.totalorder %v738, 1
        %vm742 = vmand %vm739, %vm733
        %vm743 = vmand %vm740, %vm734
        %vm744 = vmand %vm741, %vm735
        %v745 = vsel %vm742, %v714, 0.0
        %v746 = vsel %vm743, %v715, 0.0
        %v747 = vsel %vm744, %v716, 0.0
        %v748 = vpack.c.bf16 %v746, %v745
        %v749 = vpack.c.bf16 %v747, %v747
        %750 = vst [vmem:[#allocation2] sm:$0xff] %v748
        %751 = vst [vmem:[#allocation2 + $0x8] sm:$0x1] %v749
        %v752 = vld [vmem:[#allocation2] sm:$0xff]
        %v753 = vld [vmem:[%s5] sm:$0xf]
        %v754 = vld [vmem:[%s5 + $0x4] sm:$0xf]
        %v755 = vld [vmem:[%s5 + $0x8] sm:$0xf]
        %v756 = vld [vmem:[%s5 + $0xc] sm:$0xf]
        %v757 = vld [vmem:[%s5 + $0x10] sm:$0xf]
        %v758 = vld [vmem:[%s5 + $0x14] sm:$0xf]
        %v759 = vld [vmem:[%s5 + $0x18] sm:$0xf]
        %v760 = vld [vmem:[%s5 + $0x1c] sm:$0xf]
        %v761 = vld [vmem:[%s5 + $0x20] sm:$0xf]
        %v762 = vld [vmem:[%s5 + $0x24] sm:$0xf]
        %v763 = vld [vmem:[%s5 + $0x28] sm:$0xf]
        %v764 = vld [vmem:[%s5 + $0x2c] sm:$0xf]
        %v765 = vld [vmem:[%s5 + $0x30] sm:$0xf]
        %v766 = vld [vmem:[%s5 + $0x34] sm:$0xf]
        %v767 = vld [vmem:[%s5 + $0x38] sm:$0xf]
        %v768 = vld [vmem:[%s5 + $0x3c] sm:$0xf]
        %v769 = vld [vmem:[#allocation2] sm:$0xff]
        %v770 = vld [vmem:[#allocation2 + $0x8] sm:$0x1]
        %s771 = scalar_lea.vmem %s5, 64
        %v772 = vld [vmem:[%s771] sm:$0xf]
        %v773 = vld [vmem:[%s771 + $0x4] sm:$0xf]
        %v774 = vld [vmem:[%s771 + $0x8] sm:$0xf]
        %v775 = vld [vmem:[%s771 + $0xc] sm:$0xf]
        %v776 = vld [vmem:[%s771 + $0x10] sm:$0xf]
        %v777 = vld [vmem:[%s771 + $0x14] sm:$0xf]
        %v778 = vld [vmem:[%s771 + $0x18] sm:$0xf]
        %v779 = vld [vmem:[%s771 + $0x1c] sm:$0xf]
        %v780 = vld [vmem:[%s771 + $0x20] sm:$0xf]
        %v781 = vld [vmem:[%s771 + $0x24] sm:$0xf]
        %v782 = vld [vmem:[%s771 + $0x28] sm:$0xf]
        %v783 = vld [vmem:[%s771 + $0x2c] sm:$0xf]
        %v784 = vld [vmem:[%s771 + $0x30] sm:$0xf]
        %v785 = vld [vmem:[%s771 + $0x34] sm:$0xf]
        %v786 = vld [vmem:[%s771 + $0x38] sm:$0xf]
        %v787 = vld [vmem:[%s771 + $0x3c] sm:$0xf]
        %v789 = vshrl.u32 %v769, 16
        %v791 = vshll.u32 %v769, 16
        %v793 = vrot.slane %v791, 1
        %v794 = vor.u32 %v789, %v793
        %v796 = vshll.u32 %v770, 16
        %v798 = vrot.slane %v796, 1
        %v799 = vsel %vm482, %v794, %v798
        %v817 = vunpack.c.l.b16 %v772
        %v818 = vunpack.c.l.b16 %v773
        %v819 = vunpack.c.l.b16 %v774
        %v820 = vunpack.c.l.b16 %v775
        %v821 = vunpack.c.l.b16 %v776
        %v822 = vunpack.c.l.b16 %v777
        %v823 = vunpack.c.l.b16 %v778
        %v824 = vunpack.c.l.b16 %v779
        %v825 = vunpack.c.l.b16 %v780
        %v826 = vunpack.c.l.b16 %v781
        %v827 = vunpack.c.l.b16 %v782
        %v828 = vunpack.c.l.b16 %v783
        %v829 = vunpack.c.l.b16 %v784
        %v830 = vunpack.c.l.b16 %v785
        %v831 = vunpack.c.l.b16 %v786
        %v832 = vunpack.c.l.b16 %v787
        %v833 = vpack.c.b16 %v818, %v817
        %v834 = vpack.c.b16 %v820, %v819
        %v835 = vpack.c.b16 %v822, %v821
        %v836 = vpack.c.b16 %v824, %v823
        %v837 = vpack.c.b16 %v826, %v825
        %v838 = vpack.c.b16 %v828, %v827
        %v839 = vpack.c.b16 %v830, %v829
        %v840 = vpack.c.b16 %v832, %v831
        %849 = vmatprep.subr.bf16.mxu0 0
        %850 = vmatpush1.bf16.msra.mxu0 %v833
        %851 = vmatprep.subr.bf16.mxu0 0
        %852 = vmatpush1.bf16.msra.mxu0 %v834
        %853 = vmatprep.subr.bf16.mxu0 0
        %854 = vmatpush1.bf16.msra.mxu0 %v835
        %855 = vmatprep.subr.bf16.mxu0 0
        %856 = vmatpush1.bf16.msra.mxu0 %v836
        %857 = vmatprep.subr.bf16.mxu0 0
        %858 = vmatpush1.bf16.msra.mxu0 %v837
        %859 = vmatprep.subr.bf16.mxu0 0
        %860 = vmatpush1.bf16.msra.mxu0 %v838
        %861 = vmatprep.subr.bf16.mxu0 0
        %862 = vmatpush1.bf16.msra.mxu0 %v839
        %863 = vmatprep.subr.bf16.mxu0 0
        %864 = vmatpush1.bf16.msra.mxu0 %v840
        %865 = vmatprep.subr.bf16.mxu0 0
        %866 = vmatpush1.bf16.msra.mxu0 0
        %867 = vmatprep.subr.bf16.mxu0 0
        %868 = vmatpush1.bf16.msra.mxu0 0
        %869 = vmatprep.subr.bf16.mxu0 0
        %870 = vmatpush1.bf16.msra.mxu0 0
        %871 = vmatprep.subr.bf16.mxu0 0
        %872 = vmatpush1.bf16.msra.mxu0 0
        %873 = vmatprep.subr.bf16.mxu0 0
        %874 = vmatpush1.bf16.msra.mxu0 0
        %875 = vmatprep.subr.bf16.mxu0 0
        %876 = vmatpush1.bf16.msra.mxu0 0
        %877 = vmatprep.subr.bf16.mxu0 0
        %878 = vmatpush1.bf16.msra.mxu0 0
        %879 = vmatprep.subr.bf16.mxu0 0
        %880 = vmatpush1.bf16.msra.mxu0 0
        %881 = vmatprep.mubr.bf16.mxu0 0
        %882 = vmatmul.mubr.bf16.gmra.mrb[0].mxu0 %v799
        %v883 = vpop.f32.mrb[0].mxu0
        %v884 = vadd.f32 0.0, %v883
        %v885 = vpop.f32.mrb[0].mxu0
        %v886 = vpop.f32.mrb[0].mxu0
        %v887 = vadd.f32 0.0, %v886
        %v888 = vpop.f32.mrb[0].mxu0
        %889 = vdwg.mxu0
        %v906 = vunpack.c.l.b16 %v753
        %v907 = vunpack.c.l.b16 %v754
        %v908 = vunpack.c.l.b16 %v755
        %v909 = vunpack.c.l.b16 %v756
        %v910 = vunpack.c.l.b16 %v757
        %v911 = vunpack.c.l.b16 %v758
        %v912 = vunpack.c.l.b16 %v759
        %v913 = vunpack.c.l.b16 %v760
        %v914 = vunpack.c.l.b16 %v761
        %v915 = vunpack.c.l.b16 %v762
        %v916 = vunpack.c.l.b16 %v763
        %v917 = vunpack.c.l.b16 %v764
        %v918 = vunpack.c.l.b16 %v765
        %v919 = vunpack.c.l.b16 %v766
        %v920 = vunpack.c.l.b16 %v767
        %v921 = vunpack.c.l.b16 %v768
        %v922 = vpack.c.b16 %v907, %v906
        %v923 = vpack.c.b16 %v909, %v908
        %v924 = vpack.c.b16 %v911, %v910
        %v925 = vpack.c.b16 %v913, %v912
        %v926 = vpack.c.b16 %v915, %v914
        %v927 = vpack.c.b16 %v917, %v916
        %v928 = vpack.c.b16 %v919, %v918
        %v929 = vpack.c.b16 %v921, %v920
        %938 = vmatprep.subr.bf16.mxu0 0
        %939 = vmatpush1.bf16.msra.mxu0 %v922
        %940 = vmatprep.subr.bf16.mxu0 0
        %941 = vmatpush1.bf16.msra.mxu0 %v923
        %942 = vmatprep.subr.bf16.mxu0 0
        %943 = vmatpush1.bf16.msra.mxu0 %v924
        %944 = vmatprep.subr.bf16.mxu0 0
        %945 = vmatpush1.bf16.msra.mxu0 %v925
        %946 = vmatprep.subr.bf16.mxu0 0
        %947 = vmatpush1.bf16.msra.mxu0 %v926
        %948 = vmatprep.subr.bf16.mxu0 0
        %949 = vmatpush1.bf16.msra.mxu0 %v927
        %950 = vmatprep.subr.bf16.mxu0 0
        %951 = vmatpush1.bf16.msra.mxu0 %v928
        %952 = vmatprep.subr.bf16.mxu0 0
        %953 = vmatpush1.bf16.msra.mxu0 %v929
        %954 = vmatprep.subr.bf16.mxu0 0
        %955 = vmatpush1.bf16.msra.mxu0 0
        %956 = vmatprep.subr.bf16.mxu0 0
        %957 = vmatpush1.bf16.msra.mxu0 0
        %958 = vmatprep.subr.bf16.mxu0 0
        %959 = vmatpush1.bf16.msra.mxu0 0
        %960 = vmatprep.subr.bf16.mxu0 0
        %961 = vmatpush1.bf16.msra.mxu0 0
        %962 = vmatprep.subr.bf16.mxu0 0
        %963 = vmatpush1.bf16.msra.mxu0 0
        %964 = vmatprep.subr.bf16.mxu0 0
        %965 = vmatpush1.bf16.msra.mxu0 0
        %966 = vmatprep.subr.bf16.mxu0 0
        %967 = vmatpush1.bf16.msra.mxu0 0
        %968 = vmatprep.subr.bf16.mxu0 0
        %969 = vmatpush1.bf16.msra.mxu0 0
        %970 = vmatprep.mubr.bf16.mxu0 0
        %971 = vmatmul.mubr.bf16.gmra.mrb[0].mxu0 %v752
        %v972 = vpop.f32.mrb[0].mxu0
        %v973 = vadd.f32 %v884, %v972
        %v974 = vpop.f32.mrb[0].mxu0
        %v975 = vpop.f32.mrb[0].mxu0
        %v976 = vadd.f32 %v887, %v975
        %v977 = vpop.f32.mrb[0].mxu0
        %978 = vdwg.mxu0
        %v979 = vld [vmem:[#allocation2] sm:$0xfe]
        %s980 = scalar_lea.vmem %s5, 128
        %v981 = vld [vmem:[%s980] sm:$0xf]
        %v982 = vld [vmem:[%s980 + $0x4] sm:$0xf]
        %v983 = vld [vmem:[%s980 + $0x8] sm:$0xf]
        %v984 = vld [vmem:[%s980 + $0xc] sm:$0xf]
        %v985 = vld [vmem:[%s980 + $0x10] sm:$0xf]
        %v986 = vld [vmem:[%s980 + $0x14] sm:$0xf]
        %v987 = vld [vmem:[%s980 + $0x18] sm:$0xf]
        %v988 = vld [vmem:[%s980 + $0x1c] sm:$0xf]
        %v989 = vld [vmem:[%s980 + $0x20] sm:$0xf]
        %v990 = vld [vmem:[%s980 + $0x24] sm:$0xf]
        %v991 = vld [vmem:[%s980 + $0x28] sm:$0xf]
        %v992 = vld [vmem:[%s980 + $0x2c] sm:$0xf]
        %v993 = vld [vmem:[%s980 + $0x30] sm:$0xf]
        %v994 = vld [vmem:[%s980 + $0x34] sm:$0xf]
        %v995 = vld [vmem:[%s980 + $0x38] sm:$0xf]
        %v996 = vld [vmem:[%s980 + $0x3c] sm:$0xf]
        %v999 = vrot.slane %v979, 1
        %v1000 = vrot.slane %v770, 1
        %v1001 = vsel %vm634, %v999, %v1000
        %v1019 = vunpack.c.l.b16 %v981
        %v1020 = vunpack.c.l.b16 %v982
        %v1021 = vunpack.c.l.b16 %v983
        %v1022 = vunpack.c.l.b16 %v984
        %v1023 = vunpack.c.l.b16 %v985
        %v1024 = vunpack.c.l.b16 %v986
        %v1025 = vunpack.c.l.b16 %v987
        %v1026 = vunpack.c.l.b16 %v988
        %v1027 = vunpack.c.l.b16 %v989
        %v1028 = vunpack.c.l.b16 %v990
        %v1029 = vunpack.c.l.b16 %v991
        %v1030 = vunpack.c.l.b16 %v992
        %v1031 = vunpack.c.l.b16 %v993
        %v1032 = vunpack.c.l.b16 %v994
        %v1033 = vunpack.c.l.b16 %v995
        %v1034 = vunpack.c.l.b16 %v996
        %v1035 = vpack.c.b16 %v1020, %v1019
        %v1036 = vpack.c.b16 %v1022, %v1021
        %v1037 = vpack.c.b16 %v1024, %v1023
        %v1038 = vpack.c.b16 %v1026, %v1025
        %v1039 = vpack.c.b16 %v1028, %v1027
        %v1040 = vpack.c.b16 %v1030, %v1029
        %v1041 = vpack.c.b16 %v1032, %v1031
        %v1042 = vpack.c.b16 %v1034, %v1033
        %1051 = vmatprep.subr.bf16.mxu0 0
        %1052 = vmatpush1.bf16.msra.mxu0 %v1035
        %1053 = vmatprep.subr.bf16.mxu0 0
        %1054 = vmatpush1.bf16.msra.mxu0 %v1036
        %1055 = vmatprep.subr.bf16.mxu0 0
        %1056 = vmatpush1.bf16.msra.mxu0 %v1037
        %1057 = vmatprep.subr.bf16.mxu0 0
        %1058 = vmatpush1.bf16.msra.mxu0 %v1038
        %1059 = vmatprep.subr.bf16.mxu0 0
        %1060 = vmatpush1.bf16.msra.mxu0 %v1039
        %1061 = vmatprep.subr.bf16.mxu0 0
        %1062 = vmatpush1.bf16.msra.mxu0 %v1040
        %1063 = vmatprep.subr.bf16.mxu0 0
        %1064 = vmatpush1.bf16.msra.mxu0 %v1041
        %1065 = vmatprep.subr.bf16.mxu0 0
        %1066 = vmatpush1.bf16.msra.mxu0 %v1042
        %1067 = vmatprep.subr.bf16.mxu0 0
        %1068 = vmatpush1.bf16.msra.mxu0 0
        %1069 = vmatprep.subr.bf16.mxu0 0
        %1070 = vmatpush1.bf16.msra.mxu0 0
        %1071 = vmatprep.subr.bf16.mxu0 0
        %1072 = vmatpush1.bf16.msra.mxu0 0
        %1073 = vmatprep.subr.bf16.mxu0 0
        %1074 = vmatpush1.bf16.msra.mxu0 0
        %1075 = vmatprep.subr.bf16.mxu0 0
        %1076 = vmatpush1.bf16.msra.mxu0 0
        %1077 = vmatprep.subr.bf16.mxu0 0
        %1078 = vmatpush1.bf16.msra.mxu0 0
        %1079 = vmatprep.subr.bf16.mxu0 0
        %1080 = vmatpush1.bf16.msra.mxu0 0
        %1081 = vmatprep.subr.bf16.mxu0 0
        %1082 = vmatpush1.bf16.msra.mxu0 0
        %1083 = vmatprep.mubr.bf16.mxu0 0
        %1084 = vmatmul.mubr.bf16.gmra.mrb[0].mxu0 %v1001
        %v1085 = vpop.f32.mrb[0].mxu0
        %v1086 = vadd.f32 0.0, %v1085
        %v1087 = vpop.f32.mrb[0].mxu0
        %v1088 = vpop.f32.mrb[0].mxu0
        %v1089 = vadd.f32 0.0, %v1088
        %v1090 = vpop.f32.mrb[0].mxu0
        %1091 = vdwg.mxu0
        %v1092 = vadd.f32 %v973, %v1086
        %v1093 = vadd.f32 %v976, %v1089
        %v1094 = vld [vmem:[%s6] sm:$0x1]
        %v1096 = vlaneseq
        %v1097 = vshrl.u32 %v1096, 7
        %v1098 = vsub.s32 0, %v1097
        %v1099 = vrot.slane %v1094, %v1098
        %v1101 = vadd.f32 %v1092, %v1099
        %v1102 = vadd.f32 %v1093, %v1099
        %1103 = vst [vmem:[%s378] sm:$0xff] %v1101
        %1104 = vst [vmem:[%s378 + $0x8] sm:$0xff] %v1102
        %s1105 = sand.u32 %s223, 1
        %s1106 = scalar_lea.sflag [#allocation4], %s1105
        %s1107 = sand.u32 %s223, 1
        %s1108 = smul.addr %s1107, 16
        %s1109 = scalar_lea.vmem [#allocation3], %s1108
        // Predicated region
        $region49: #{tpu_custom_call.1} parent=47 // pred_check
          %p1110 = pneg %p233
        $region50: #{tpu_custom_call.1} parent=47 // pred_check_branch
          %1112 = sbr.rel (%p1110) target = $region52
        $region51: #{tpu_custom_call.1} parent=47 // pred_region
          %s1113 = smul.u32 2, %s26
          %s1115 = ssub.s32 256, 256
          %1116 = vsyncadd %s1106, %s1115
          %s1117 = smul.addr %s25, 6
          %s1118 = sadd.s32 %s1113, %s1117
          %s1119 = smul.addr %s1118, 128
          %s1120 = scalar_lea.hbm %s7, %s1119
          %s1121 = sshll.u32 %s1109, 4
          %s1122 = int_to_ptr.vmem [resolvable:$true] %s1121
          %1127 = dma.vmem_to_hbm [thread:$0]  %s1122, 256, %s1120, %s1106, 128, 128, 8
        $region52: #{tpu_custom_call.1} parent=47 // pred_fallthru
          _
      $region48: #{tpu_custom_call.1} parent=5 // pred_fallthru
        _
      %p1128 = scmp.le.s32.totalorder 2, %s16
      // Predicated region
      $region53: #{tpu_custom_call.1} parent=5 // pred_check
        %p1129 = pneg %p1128
      $region54: #{tpu_custom_call.1} parent=5 // pred_check_branch
        %1131 = sbr.rel (%p1129) target = $region56
      $region55: #{tpu_custom_call.1} parent=5 // pred_region
        %s1132 = ssub.s32 %s16, 2
        // Predicated region
        $region57: #{tpu_custom_call.1} parent=55 // pred_check
          %p1133 = pneg %p239
        $region58: #{tpu_custom_call.1} parent=55 // pred_check_branch
          %1135 = sbr.rel (%p1133) target = $region60
        $region59: #{tpu_custom_call.1} parent=55 // pred_region
          %s1136 = sand.u32 %s224, 1
          %s1137 = scalar_lea.sflag [#allocation4], %s1136
          %s1138 = sand.u32 %s224, 1
          %s1139 = smul.addr %s1138, 16
          %s1140 = scalar_lea.vmem [#allocation3], %s1139
          %1141 = dma.done %s1137, 256
        $region60: #{tpu_custom_call.1} parent=55 // pred_fallthru
          _
      $region56: #{tpu_custom_call.1} parent=5 // pred_fallthru
        _
    $region6: #{tpu_custom_call.1} parent=1 // loop_footer
      %s20 = sadd.s32 1, %s16
    $region7: #{tpu_custom_call.1} parent=1 // loop_footer_branch
      %15 = sbr.rel target = $region3
    $region8: #{tpu_custom_call.1} parent=1 // loop_exit
      _
    %1142 = vsyncpa [#allocation4], 1
    %s1143 = scalar_lea.sflag [#allocation4], 1
    %1144 = vsyncpa %s1143, 1

// kernel: tpu_custom_call.1
$region0: #{tpu_custom_call.1}
  #allocation0 [shape = 'u32[]', space=smem, size = 0x4, offset = 0x4, fixed_abs, tag = 'smem constant byte address 0x4 - core index']
  #allocation1 [shape = 'u32[144,128]{1,0:T(1,128)}', space=vmem, size = 0x12000, scoped, tag = 'internal scratch']
  #allocation2 [shape = 'bf16[32,128]{1,0:T(16,128)(2,1)}', space=vmem, size = 0x2000, scoped, tag = 'scratch operand']
  %s0 = inlined_call_operand.vmem [shape: bf16[2,48,32], index: 0, kind: input, shape index: {}]
  %s1 = inlined_call_operand.vmem [shape: bf16[2,48,32], index: 1, kind: input, shape index: {}]
  %s2 = inlined_call_operand.vmem [shape: bf16[2,48,32], index: 2, kind: input, shape index: {}]
  %s3 = inlined_call_operand.vmem [shape: bf16[3,32,128], index: 3, kind: input, shape index: {}]
  %s4 = inlined_call_operand.vmem [shape: f32[1,128], index: 4, kind: input, shape index: {}]
  %s5 = inlined_call_operand.vmem [shape: bf16[3,128,128], index: 5, kind: input, shape index: {}]
  %s6 = inlined_call_operand.vmem [shape: f32[1,128], index: 6, kind: input, shape index: {}]
  %s7 = inlined_call_operand.hbm [shape: f32[2,48,128], index: 7, kind: output, shape index: {}]
  %s8 = sld [smem:[#allocation0]]
  $region61: #{tpu_custom_call.1} parent=0
    _
  %s10 = ssub.s32 1, %s8
  %s11 = scalar_select 0, %s10, %s8
  $region1: #{tpu_custom_call.1} parent=0
    #allocation3 [shape = 'u8[16384]{0}', space=vmem, size = 0x4000, scoped, tag = 'output window, operand 0']
    #allocation4 [shape = 's32[2]{0}', space=sflag, size = 0x8, scoped, tag = 'scoped memory for tpu_custom_call.1']
    %12 = vsyncpa [#allocation4], 0
    %s13 = scalar_lea.sflag [#allocation4], 1
    %14 = vsyncpa %s13, 0
    loop: start=0, step=1, limit=8
    $region2: #{tpu_custom_call.1} parent=1 // loop_pre_header
      _
    $region3: #{tpu_custom_call.1} parent=1 // loop_header
      %s16 = sphi 0, %s20
      %p17 = scmp.ge.s32.totalorder %s16, 8
      %s23 = sphi 0, %s35
      %s24 = sphi 0, %s31
      %s25 = sphi 0, %s23
      %s26 = sphi 0, %s24
      %s27 = sphi 0, %s25
      %s28 = sphi 0, %s26
      %s46 = sphi 0, %s48
      %s49 = sphi 0, %s46
      %s50 = sphi 0, %s49
      %s66 = sphi 0, %s50
      %s74 = sphi 0, %s76
      %s77 = sphi 0, %s74
      %s78 = sphi 0, %s77
      %s94 = sphi 0, %s78
      %s108 = sphi 0, %s110
      %s111 = sphi 0, %s108
      %s112 = sphi 0, %s111
      %s128 = sphi 0, %s112
      %s132 = sphi 0, %s132
      %s134 = sphi 0, %s132
      %s135 = sphi 0, %s134
      %s149 = sphi 0, %s135
      %s153 = sphi 0, %s153
      %s155 = sphi 0, %s153
      %s156 = sphi 0, %s155
      %s170 = sphi 0, %s156
      %s174 = sphi 0, %s174
      %s176 = sphi 0, %s174
      %s177 = sphi 0, %s176
      %s191 = sphi 0, %s177
      %s195 = sphi 0, %s195
      %s197 = sphi 0, %s195
      %s198 = sphi 0, %s197
      %s212 = sphi 0, %s198
      %s220 = sphi 0, %s222
      %s223 = sphi 0, %s220
      %s224 = sphi 0, %s223
      %s240 = sphi 0, %s224
    $region4: #{tpu_custom_call.1} parent=1 // loop_header_branch
      %19 = sbr.rel (%p17) target = $region8
    $region5: #{tpu_custom_call.1} parent=1 // loop_body
      %s21 = ssub.s32 %s16, 1
      %s22 = ssub.s32 %s16, 2
      %s29 = sadd.s32 1, %s24
      %p30 = scmp.ge.s32.totalorder %s29, 3
      %s31 = scalar_select %p30, 0, %s29
      %s32 = sadd.s32 1, %s23
      %s33 = scalar_select %p30, %s32, %s23
      %p34 = scmp.ge.s32.totalorder %s33, 2
      %s35 = scalar_select %p34, 0, %s33
      %s36 = ssub.s32 %s24, 1
      %p37 = scmp.gt.s32.totalorder %s36, 0
      %s38 = scalar_select %p37, %s36, 0
      %s39 = ssub.s32 %s31, 1
      %p40 = scmp.gt.s32.totalorder %s39, 0
      %s41 = scalar_select %p40, %s39, 0
      %s42 = ssub.s32 %s23, %s35
      %s43 = ssub.s32 %s38, %s41
      %s44 = sor.u32 %s42, %s43
      %p45 = scmp.eq.s32.totalorder %s44, 0
      %s47 = sadd.s32 %s46, 1
      %s48 = scalar_select %p45, %s46, %s47
      %p51 = pneg %p45
      %p52 = scmp.eq.s32.totalorder %s16, 5
      %p53 = por %p51, %p52
      %p54 = scmp.ne.s32.totalorder %s46, %s49
      %p55 = scmp.eq.s32.totalorder %s16, 0
      %p56 = por %p54, %p55
      %p57 = scmp.ne.s32.totalorder %s46, %s49
      %p58 = scmp.eq.s32.totalorder %s21, 5
      %p59 = por %p57, %p58
      %p60 = scmp.ne.s32.totalorder %s49, %s50
      %p61 = scmp.eq.s32.totalorder %s21, 0
      %p62 = por %p60, %p61
      %p63 = scmp.ne.s32.totalorder %s49, %s50
      %p64 = scmp.eq.s32.totalorder %s22, 5
      %p65 = por %p63, %p64
      %p67 = scmp.ne.s32.totalorder %s50, %s66
      %p68 = scmp.eq.s32.totalorder %s22, 0
      %p69 = por %p67, %p68
      %s70 = ssub.s32 %s23, %s35
      %s71 = ssub.s32 %s24, %s31
      %s72 = sor.u32 %s70, %s71
      %p73 = scmp.eq.s32.totalorder %s72, 0
      %s75 = sadd.s32 %s74, 1
      %s76 = scalar_select %p73, %s74, %s75
      %p79 = pneg %p73
      %p80 = scmp.eq.s32.totalorder %s16, 5
      %p81 = por %p79, %p80
      %p82 = scmp.ne.s32.totalorder %s74, %s77
      %p83 = scmp.eq.s32.totalorder %s16, 0
      %p84 = por %p82, %p83
      %p85 = scmp.ne.s32.totalorder %s74, %s77
      %p86 = scmp.eq.s32.totalorder %s21, 5
      %p87 = por %p85, %p86
      %p88 = scmp.ne.s32.totalorder %s77, %s78
      %p89 = scmp.eq.s32.totalorder %s21, 0
      %p90 = por %p88, %p89
      %p91 = scmp.ne.s32.totalorder %s77, %s78
      %p92 = scmp.eq.s32.totalorder %s22, 5
      %p93 = por %p91, %p92
      %p95 = scmp.ne.s32.totalorder %s78, %s94
      %p96 = scmp.eq.s32.totalorder %s22, 0
      %p97 = por %p95, %p96
      %s98 = sadd.s32 %s24, 1
      %p99 = scmp.lt.s32.totalorder %s98, 2
      %s100 = scalar_select %p99, %s98, 2
      %s101 = sadd.s32 %s31, 1
      %p102 = scmp.lt.s32.totalorder %s101, 2
      %s103 = scalar_select %p102, %s101, 2
      %s104 = ssub.s32 %s23, %s35
      %s105 = ssub.s32 %s100, %s103
      %s106 = sor.u32 %s104, %s105
      %p107 = scmp.eq.s32.totalorder %s106, 0
      %s109 = sadd.s32 %s108, 1
      %s110 = scalar_select %p107, %s108, %s109
      %p113 = pneg %p107
      %p114 = scmp.eq.s32.totalorder %s16, 5
      %p115 = por %p113, %p114
      %p116 = scmp.ne.s32.totalorder %s108, %s111
      %p117 = scmp.eq.s32.totalorder %s16, 0
      %p118 = por %p116, %p117
      %p119 = scmp.ne.s32.totalorder %s108, %s111
      %p120 = scmp.eq.s32.totalorder %s21, 5
      %p121 = por %p119, %p120
      %p122 = scmp.ne.s32.totalorder %s111, %s112
      %p123 = scmp.eq.s32.totalorder %s21, 0
      %p124 = por %p122, %p123
      %p125 = scmp.ne.s32.totalorder %s111, %s112
      %p126 = scmp.eq.s32.totalorder %s22, 5
      %p127 = por %p125, %p126
      %p129 = scmp.ne.s32.totalorder %s112, %s128
      %p130 = scmp.eq.s32.totalorder %s22, 0
      %p131 = por %p129, %p130
      %s133 = sadd.s32 %s132, 1
      %p136 = scmp.eq.s32.totalorder %s16, 5
      %p137 = scmp.ne.s32.totalorder %s132, %s134
      %p138 = scmp.eq.s32.totalorder %s16, 0
      %p139 = por %p137, %p138
      %p140 = scmp.ne.s32.totalorder %s132, %s134
      %p141 = scmp.eq.s32.totalorder %s21, 5
      %p142 = por %p140, %p141
      %p143 = scmp.ne.s32.totalorder %s134, %s135
      %p144 = scmp.eq.s32.totalorder %s21, 0
      %p145 = por %p143, %p144
      %p146 = scmp.ne.s32.totalorder %s134, %s135
      %p147 = scmp.eq.s32.totalorder %s22, 5
      %p148 = por %p146, %p147
      %p150 = scmp.ne.s32.totalorder %s135, %s149
      %p151 = scmp.eq.s32.totalorder %s22, 0
      %p152 = por %p150, %p151
      %s154 = sadd.s32 %s153, 1
      %p157 = scmp.eq.s32.totalorder %s16, 5
      %p158 = scmp.ne.s32.totalorder %s153, %s155
      %p159 = scmp.eq.s32.totalorder %s16, 0
      %p160 = por %p158, %p159
      %p161 = scmp.ne.s32.totalorder %s153, %s155
      %p162 = scmp.eq.s32.totalorder %s21, 5
      %p163 = por %p161, %p162
      %p164 = scmp.ne.s32.totalorder %s155, %s156
      %p165 = scmp.eq.s32.totalorder %s21, 0
      %p166 = por %p164, %p165
      %p167 = scmp.ne.s32.totalorder %s155, %s156
      %p168 = scmp.eq.s32.totalorder %s22, 5
      %p169 = por %p167, %p168
      %p171 = scmp.ne.s32.totalorder %s156, %s170
      %p172 = scmp.eq.s32.totalorder %s22, 0
      %p173 = por %p171, %p172
      %s175 = sadd.s32 %s174, 1
      %p178 = scmp.eq.s32.totalorder %s16, 5
      %p179 = scmp.ne.s32.totalorder %s174, %s176
      %p180 = scmp.eq.s32.totalorder %s16, 0
      %p181 = por %p179, %p180
      %p182 = scmp.ne.s32.totalorder %s174, %s176
      %p183 = scmp.eq.s32.totalorder %s21, 5
      %p184 = por %p182, %p183
      %p185 = scmp.ne.s32.totalorder %s176, %s177
      %p186 = scmp.eq.s32.totalorder %s21, 0
      %p187 = por %p185, %p186
      %p188 = scmp.ne.s32.totalorder %s176, %s177
      %p189 = scmp.eq.s32.totalorder %s22, 5
      %p190 = por %p188, %p189
      %p192 = scmp.ne.s32.totalorder %s177, %s191
      %p193 = scmp.eq.s32.totalorder %s22, 0
      %p194 = por %p192, %p193
      %s196 = sadd.s32 %s195, 1
      %p199 = scmp.eq.s32.totalorder %s16, 5
      %p200 = scmp.ne.s32.totalorder %s195, %s197
      %p201 = scmp.eq.s32.totalorder %s16, 0
      %p202 = por %p200, %p201
      %p203 = scmp.ne.s32.totalorder %s195, %s197
      %p204 = scmp.eq.s32.totalorder %s21, 5
      %p205 = por %p203, %p204
      %p206 = scmp.ne.s32.totalorder %s197, %s198
      %p207 = scmp.eq.s32.totalorder %s21, 0
      %p208 = por %p206, %p207
      %p209 = scmp.ne.s32.totalorder %s197, %s198
      %p210 = scmp.eq.s32.totalorder %s22, 5
      %p211 = por %p209, %p210
      %p213 = scmp.ne.s32.totalorder %s198, %s212
      %p214 = scmp.eq.s32.totalorder %s22, 0
      %p215 = por %p213, %p214
      %s216 = ssub.s32 %s23, %s35
      %s217 = ssub.s32 %s24, %s31
      %s218 = sor.u32 %s216, %s217
      %p219 = scmp.eq.s32.totalorder %s218, 0
      %s221 = sadd.s32 %s220, 1
      %s222 = scalar_select %p219, %s220, %s221
      %p225 = pneg %p219
      %p226 = scmp.eq.s32.totalorder %s16, 5
      %p227 = por %p225, %p226
      %p228 = scmp.ne.s32.totalorder %s220, %s223
      %p229 = scmp.eq.s32.totalorder %s16, 0
      %p230 = por %p228, %p229
      %p231 = scmp.ne.s32.totalorder %s220, %s223
      %p232 = scmp.eq.s32.totalorder %s21, 5
      %p233 = por %p231, %p232
      %p234 = scmp.ne.s32.totalorder %s223, %s224
      %p235 = scmp.eq.s32.totalorder %s21, 0
      %p236 = por %p234, %p235
      %p237 = scmp.ne.s32.totalorder %s223, %s224
      %p238 = scmp.eq.s32.totalorder %s22, 5
      %p239 = por %p237, %p238
      %p241 = scmp.ne.s32.totalorder %s224, %s240
      %p242 = scmp.eq.s32.totalorder %s22, 0
      %p243 = por %p241, %p242
      %p244 = scmp.le.s32.totalorder 1, %s16
      %p245 = scmp.lt.s32.totalorder %s16, 7
      %p246 = pnand %p244, %p245
      %p247 = pneg %p246
      // Predicated region
      $region9: #{tpu_custom_call.1} parent=5 // pred_check
        _
      $region10: #{tpu_custom_call.1} parent=5 // pred_check_branch
        %249 = sbr.rel (%p246) target = $region12
      $region11: #{tpu_custom_call.1} parent=5 // pred_region
        %s250 = ssub.s32 %s16, 1
        // Predicated region
        $region13: #{tpu_custom_call.1} parent=11 // pred_check
          %p251 = pneg %p145
        $region14: #{tpu_custom_call.1} parent=11 // pred_check_branch
          %253 = sbr.rel (%p251) target = $region16
        $region15: #{tpu_custom_call.1} parent=11 // pred_region
          _
        $region16: #{tpu_custom_call.1} parent=11 // pred_fallthru
          _
        // Predicated region
        $region17: #{tpu_custom_call.1} parent=11 // pred_check
          %p254 = pneg %p166
        $region18: #{tpu_custom_call.1} parent=11 // pred_check_branch
          %256 = sbr.rel (%p254) target = $region20
        $region19: #{tpu_custom_call.1} parent=11 // pred_region
          _
        $region20: #{tpu_custom_call.1} parent=11 // pred_fallthru
          _
        // Predicated region
        $region21: #{tpu_custom_call.1} parent=11 // pred_check
          %p257 = pneg %p187
        $region22: #{tpu_custom_call.1} parent=11 // pred_check_branch
          %259 = sbr.rel (%p257) target = $region24
        $region23: #{tpu_custom_call.1} parent=11 // pred_region
          _
        $region24: #{tpu_custom_call.1} parent=11 // pred_fallthru
          _
        // Predicated region
        $region25: #{tpu_custom_call.1} parent=11 // pred_check
          %p260 = pneg %p208
        $region26: #{tpu_custom_call.1} parent=11 // pred_check_branch
          %262 = sbr.rel (%p260) target = $region28
        $region27: #{tpu_custom_call.1} parent=11 // pred_region
          _
        $region28: #{tpu_custom_call.1} parent=11 // pred_fallthru
          _
      $region12: #{tpu_custom_call.1} parent=5 // pred_fallthru
        _
      %p263 = scmp.lt.s32.totalorder %s16, 6
      // Predicated region
      $region29: #{tpu_custom_call.1} parent=5 // pred_check
        %p264 = pneg %p263
      $region30: #{tpu_custom_call.1} parent=5 // pred_check_branch
        %266 = sbr.rel (%p264) target = $region32
      $region31: #{tpu_custom_call.1} parent=5 // pred_region
        // Predicated region
        $region33: #{tpu_custom_call.1} parent=31 // pred_check
          %p267 = pneg %p56
        $region34: #{tpu_custom_call.1} parent=31 // pred_check_branch
          %269 = sbr.rel (%p267) target = $region36
        $region35: #{tpu_custom_call.1} parent=31 // pred_region
          %s270 = ssub.s32 %s24, 1
          %p271 = scmp.gt.s32.totalorder %s270, 0
          %s272 = scalar_select %p271, %s270, 0
          %s273 = smul.u32 2, %s272
          %p274 = scmp.lt.s32.totalorder %s23, 1
          %s275 = scalar_select %p274, %s23, 1
          %p276 = scmp.lt.s32.totalorder %s273, 5
          %s277 = scalar_select %p276, %s273, 5
          %s278 = smul.addr %s275, 6
          %s279 = sadd.s32 %s277, %s278
          %s280 = smul.addr %s279, 4
          %s281 = scalar_lea.vmem %s0, %s280
          %s282 = ssub.s32 %s24, 1
          %p283 = scmp.gt.s32.totalorder %s282, 0
          %s284 = scalar_select %p283, %s282, 0
          %s285 = smul.u32 2, %s284
        $region36: #{tpu_custom_call.1} parent=31 // pred_fallthru
          _
        // Predicated region
        $region37: #{tpu_custom_call.1} parent=31 // pred_check
          %p286 = pneg %p84
        $region38: #{tpu_custom_call.1} parent=31 // pred_check_branch
          %288 = sbr.rel (%p286) target = $region40
        $region39: #{tpu_custom_call.1} parent=31 // pred_region
          %s289 = smul.u32 2, %s24
          %p290 = scmp.lt.s32.totalorder %s23, 1
          %s291 = scalar_select %p290, %s23, 1
          %p292 = scmp.lt.s32.totalorder %s289, 5
          %s293 = scalar_select %p292, %s289, 5
          %s294 = smul.addr %s291, 6
          %s295 = sadd.s32 %s293, %s294
          %s296 = smul.addr %s295, 4
          %s297 = scalar_lea.vmem %s1, %s296
          %s298 = smul.u32 2, %s24
        $region40: #{tpu_custom_call.1} parent=31 // pred_fallthru
          _
        // Predicated region
        $region41: #{tpu_custom_call.1} parent=31 // pred_check
          %p299 = pneg %p118
        $region42: #{tpu_custom_call.1} parent=31 // pred_check_branch
          %301 = sbr.rel (%p299) target = $region44
        $region43: #{tpu_custom_call.1} parent=31 // pred_region
          %s302 = sadd.s32 %s24, 1
          %p303 = scmp.lt.s32.totalorder %s302, 2
          %s304 = scalar_select %p303, %s302, 2
          %s305 = smul.u32 2, %s304
          %p306 = scmp.lt.s32.totalorder %s23, 1
          %s307 = scalar_select %p306, %s23, 1
          %p308 = scmp.lt.s32.totalorder %s305, 5
          %s309 = scalar_select %p308, %s305, 5
          %s310 = smul.addr %s307, 6
          %s311 = sadd.s32 %s309, %s310
          %s312 = smul.addr %s311, 4
          %s313 = scalar_lea.vmem %s2, %s312
          %s314 = sadd.s32 %s24, 1
          %p315 = scmp.lt.s32.totalorder %s314, 2
          %s316 = scalar_select %p315, %s314, 2
          %s317 = smul.u32 2, %s316
        $region44: #{tpu_custom_call.1} parent=31 // pred_fallthru
          _
      $region32: #{tpu_custom_call.1} parent=5 // pred_fallthru
        _
      %p318 = scmp.le.s32.totalorder 1, %s16
      %p319 = scmp.lt.s32.totalorder %s16, 7
      %p320 = pnand %p318, %p319
      %p321 = pneg %p320
      // Predicated region
      $region45: #{tpu_custom_call.1} parent=5 // pred_check
        _
      $region46: #{tpu_custom_call.1} parent=5 // pred_check_branch
        %323 = sbr.rel (%p320) target = $region48
      $region47: #{tpu_custom_call.1} parent=5 // pred_region
        %s324 = ssub.s32 %s16, 1
        %s325 = ssub.s32 %s26, 1
        %p326 = scmp.gt.s32.totalorder %s325, 0
        %s327 = scalar_select %p326, %s325, 0
        %s328 = smul.u32 2, %s327
        %p329 = scmp.lt.s32.totalorder %s25, 1
        %s330 = scalar_select %p329, %s25, 1
        %p331 = scmp.lt.s32.totalorder %s328, 5
        %s332 = scalar_select %p331, %s328, 5
        %s333 = smul.addr %s330, 6
        %s334 = sadd.s32 %s332, %s333
        %s335 = smul.addr %s334, 4
        %s336 = scalar_lea.vmem %s0, %s335
        %p337 = pneg %p62
        %p338 = pneg %p59
        %s339 = smul.u32 2, %s26
        %p340 = scmp.lt.s32.totalorder %s25, 1
        %s341 = scalar_select %p340, %s25, 1
        %p342 = scmp.lt.s32.totalorder %s339, 5
        %s343 = scalar_select %p342, %s339, 5
        %s344 = smul.addr %s341, 6
        %s345 = sadd.s32 %s343, %s344
        %s346 = smul.addr %s345, 4
        %s347 = scalar_lea.vmem %s1, %s346
        %p348 = pneg %p90
        %p349 = pneg %p87
        %s350 = sadd.s32 %s26, 1
        %p351 = scmp.lt.s32.totalorder %s350, 2
        %s352 = scalar_select %p351, %s350, 2
        %s353 = smul.u32 2, %s352
        %p354 = scmp.lt.s32.totalorder %s25, 1
        %s355 = scalar_select %p354, %s25, 1
        %p356 = scmp.lt.s32.totalorder %s353, 5
        %s357 = scalar_select %p356, %s353, 5
        %s358 = smul.addr %s355, 6
        %s359 = sadd.s32 %s357, %s358
        %s360 = smul.addr %s359, 4
        %s361 = scalar_lea.vmem %s2, %s360
        %p362 = pneg %p124
        %p363 = pneg %p121
        %p364 = pneg %p145
        %p365 = pneg %p142
        %p366 = pneg %p166
        %p367 = pneg %p163
        %p368 = pneg %p187
        %p369 = pneg %p184
        %p370 = pneg %p208
        %p371 = pneg %p205
        %p372 = pneg %p236
        %p373 = pneg %p233
        %s374 = sand.u32 %s223, 1
        %s375 = scalar_lea.sflag [#allocation4], %s374
        %s376 = sand.u32 %s223, 1
        %s377 = smul.addr %s376, 16
        %s378 = scalar_lea.vmem [#allocation3], %s377
        %s379 = ssub.s32 %s26, 1
        %p380 = scmp.gt.s32.totalorder %s379, 0
        %s381 = scalar_select %p380, %s379, 0
        %s382 = smul.u32 2, %s381
        %p383 = scmp.lt.s32.totalorder %s25, 1
        %s384 = scalar_select %p383, %s25, 1
        %p385 = scmp.lt.s32.totalorder %s382, 5
        %s386 = scalar_select %p385, %s382, 5
        %s387 = smul.addr %s384, 6
        %s388 = sadd.s32 %s386, %s387
        %s389 = smul.addr %s388, 4
        %s390 = scalar_lea.vmem %s0, %s389
        %s391 = ssub.s32 %s26, 1
        %p392 = scmp.gt.s32.totalorder %s391, 0
        %s393 = scalar_select %p392, %s391, 0
        %s394 = smul.u32 2, %s393
        %s395 = smul.u32 2, %s26
        %p396 = scmp.lt.s32.totalorder %s25, 1
        %s397 = scalar_select %p396, %s25, 1
        %p398 = scmp.lt.s32.totalorder %s395, 5
        %s399 = scalar_select %p398, %s395, 5
        %s400 = smul.addr %s397, 6
        %s401 = sadd.s32 %s399, %s400
        %s402 = smul.addr %s401, 4
        %s403 = scalar_lea.vmem %s1, %s402
        %s404 = smul.u32 2, %s26
        %s405 = sadd.s32 %s26, 1
        %p406 = scmp.lt.s32.totalorder %s405, 2
        %s407 = scalar_select %p406, %s405, 2
        %s408 = smul.u32 2, %s407
        %p409 = scmp.lt.s32.totalorder %s25, 1
        %s410 = scalar_select %p409, %s25, 1
        %p411 = scmp.lt.s32.totalorder %s408, 5
        %s412 = scalar_select %p411, %s408, 5
        %s413 = smul.addr %s410, 6
        %s414 = sadd.s32 %s412, %s413
        %s415 = smul.addr %s414, 4
        %s416 = scalar_lea.vmem %s2, %s415
        %s417 = sadd.s32 %s26, 1
        %p418 = scmp.lt.s32.totalorder %s417, 2
        %s419 = scalar_select %p418, %s417, 2
        %s420 = smul.u32 2, %s419
        %s421 = smul.u32 2, %s26
        %s425 = smul.u32 %s26, 16
        %v426 = vld [vmem:[%s403] sm:$0xf]
        %v427 = vld [vmem:[%s403 + $0x4] sm:$0xf]
        %v428 = vld [vmem:[%s390 + $0x4] sm:$0xf]
        %v429 = vld [vmem:[%s416] sm:$0xf]
        %s430 = ssub.s32 %s425, 2
        %v431 = vlaneseq
        %v432 = vshrl.u32 %v431, 7
        %v433 = vstv %s430
        %v434 = vadd.s32 %v433, %v432
        %s435 = sadd.s32 %s425, 16
        %v436 = vstv %s435
        %v437 = vadd.s32 %v436, %v432
        %vm438 = vcmp.ge.s32.totalorder %v434, 0
        %vm439 = vcmp.lt.s32.totalorder %v434, 40
        %vm440 = vmand %vm438, %vm439
        %v441 = vsel %vm440, 1, 0
        %vm442 = vcmp.eq.s32.totalorder %v441, 1
        %vm443 = vmpackc.low %vm442, %vm442
        %v444 = vsel %vm443, 65537, 0
        %v445 = vrot.slane %v444, 5
        %vm446 = vcmp.ne.s16.totalorder %v445, 0
        %v447 = vsel %vm446, %v428, 0
        %vm448 = vcmp.lt.s32.totalorder %v437, 40
        %v449 = vsel %vm448, 1, 0
        %vm450 = vcmp.eq.s32.totalorder %v449, 1
        %vm451 = vmpackc.low %vm450, %vm450
        %v452 = vsel %vm451, %v429, 0
        %v454 = vunpack.c.l.b16 %v447
        %v455 = vpack.c.b16 %v454, %v454
        %v456 = vrot.slane %v455, 3
        %v459 = vunpack.c.l.b16 %v426
        %v460 = vunpack.c.l.b16 %v427
        %v461 = vpack.c.b16 %v460, %v459
        %v462 = vrot.slane %v461, 7
        %v464 = vunpack.c.l.b16 %v452
        %v465 = vpack.c.b16 %v464, %v464
        %v466 = vrot.slane %v465, 7
        %vm467 = vcmask 1040384
        %v470 = vsel %vm467, %v456, %v462
        %v472 = vsel %vm467, %v462, %v466
        %v473 = vld [vmem:[%s3] sm:$0xf]
        %v474 = vld [vmem:[%s3 + $0x4] sm:$0xf]
        %v475 = vld [vmem:[%s3 + $0x8] sm:$0xf]
        %v476 = vld [vmem:[%s3 + $0xc] sm:$0xf]
        %s477 = scalar_lea.vmem %s3, 16
        %v478 = vld [vmem:[%s477] sm:$0xf]
        %v479 = vld [vmem:[%s477 + $0x4] sm:$0xf]
        %v480 = vld [vmem:[%s477 + $0x8] sm:$0xf]
        %v481 = vld [vmem:[%s477 + $0xc] sm:$0xf]
        %vm482 = vsmask.f32 7424
        %v483 = vshrl.u32 %v470, 16
        %v485 = vshll.u32 %v470, 16
        %v487 = vrot.slane %v485, 1
        %v488 = vor.u32 %v483, %v487
        %v489 = vshll.u32 %v472, 16
        %v491 = vrot.slane %v489, 1
        %v492 = vsel %vm482, %v488, %v491
        %v493 = vshrl.u32 %v472, 16
        %v495 = vor.u32 %v493, %v491
        %v500 = vunpack.c.l.b16 %v478
        %v501 = vunpack.c.l.b16 %v479
        %v502 = vunpack.c.l.b16 %v480
        %v503 = vunpack.c.l.b16 %v481
        %v504 = vpack.c.b16 %v501, %v500
        %v505 = vpack.c.b16 %v503, %v502
        %vm508 = vcmask 261120
        %v510 = vsel %vm508, %v492, 0
        %v513 = vsel %vm508, %v495, 0
        %515 = vmatprep.subr.bf16.mxu0 0
        %516 = vmatpush1.bf16.msra.mxu0 %v504
        %517 = vmatprep.subr.bf16.mxu0 0
        %518 = vmatpush1.bf16.msra.mxu0 %v505
        %519 = vmatprep.subr.bf16.mxu0 0
        %520 = vmatpush1.bf16.msra.mxu0 0
        %521 = vmatprep.subr.bf16.mxu0 0
        %522 = vmatpush1.bf16.msra.mxu0 0
        %523 = vmatprep.subr.bf16.mxu0 0
        %524 = vmatpush1.bf16.msra.mxu0 0
        %525 = vmatprep.subr.bf16.mxu0 0
        %526 = vmatpush1.bf16.msra.mxu0 0
        %527 = vmatprep.subr.bf16.mxu0 0
        %528 = vmatpush1.bf16.msra.mxu0 0
        %529 = vmatprep.subr.bf16.mxu0 0
        %530 = vmatpush1.bf16.msra.mxu0 0
        %531 = vmatprep.subr.bf16.mxu0 0
        %532 = vmatpush1.bf16.msra.mxu0 0
        %533 = vmatprep.subr.bf16.mxu0 0
        %534 = vmatpush1.bf16.msra.mxu0 0
        %535 = vmatprep.subr.bf16.mxu0 0
        %536 = vmatpush1.bf16.msra.mxu0 0
        %537 = vmatprep.subr.bf16.mxu0 0
        %538 = vmatpush1.bf16.msra.mxu0 0
        %539 = vmatprep.subr.bf16.mxu0 0
        %540 = vmatpush1.bf16.msra.mxu0 0
        %541 = vmatprep.subr.bf16.mxu0 0
        %542 = vmatpush1.bf16.msra.mxu0 0
        %543 = vmatprep.subr.bf16.mxu0 0
        %544 = vmatpush1.bf16.msra.mxu0 0
        %545 = vmatprep.subr.bf16.mxu0 0
        %546 = vmatpush1.bf16.msra.mxu0 0
        %547 = vmatprep.mubr.bf16.mxu0 0
        %548 = vmatmul.mubr.bf16.gmra.mrb[0].mxu0 %v510
        %v549 = vpop.f32.mrb[0].mxu0
        %v550 = vadd.f32 0.0, %v549
        %v551 = vpop.f32.mrb[0].mxu0
        %v552 = vpop.f32.mrb[0].mxu0
        %v553 = vadd.f32 0.0, %v552
        %v554 = vpop.f32.mrb[0].mxu0
        %555 = vmatprep.mubr.bf16.mxu0 0
        %556 = vmatmul.mubr.bf16.gmra.mrb[0].mxu0 %v513
        %v557 = vpop.f32.mrb[0].mxu0
        %v558 = vadd.f32 0.0, %v557
        %v559 = vpop.f32.mrb[0].mxu0
        %v560 = vpop.f32.mrb[0].mxu0
        %v561 = vpop.f32.mrb[0].mxu0
        %562 = vdwg.mxu0
        %v567 = vunpack.c.l.b16 %v473
        %v568 = vunpack.c.l.b16 %v474
        %v569 = vunpack.c.l.b16 %v475
        %v570 = vunpack.c.l.b16 %v476
        %v571 = vpack.c.b16 %v568, %v567
        %v572 = vpack.c.b16 %v570, %v569
        %v575 = vsel %vm508, %v470, 0
        %v577 = vsel %vm508, %v472, 0
        %579 = vmatprep.subr.bf16.mxu0 0
        %580 = vmatpush1.bf16.msra.mxu0 %v571
        %581 = vmatprep.subr.bf16.mxu0 0
        %582 = vmatpush1.bf16.msra.mxu0 %v572
        %583 = vmatprep.subr.bf16.mxu0 0
        %584 = vmatpush1.bf16.msra.mxu0 0
        %585 = vmatprep.subr.bf16.mxu0 0
        %586 = vmatpush1.bf16.msra.mxu0 0
        %587 = vmatprep.subr.bf16.mxu0 0
        %588 = vmatpush1.bf16.msra.mxu0 0
        %589 = vmatprep.subr.bf16.mxu0 0
        %590 = vmatpush1.bf16.msra.mxu0 0
        %591 = vmatprep.subr.bf16.mxu0 0
        %592 = vmatpush1.bf16.msra.mxu0 0
        %593 = vmatprep.subr.bf16.mxu0 0
        %594 = vmatpush1.bf16.msra.mxu0 0
        %595 = vmatprep.subr.bf16.mxu0 0
        %596 = vmatpush1.bf16.msra.mxu0 0
        %597 = vmatprep.subr.bf16.mxu0 0
        %598 = vmatpush1.bf16.msra.mxu0 0
        %599 = vmatprep.subr.bf16.mxu0 0
        %600 = vmatpush1.bf16.msra.mxu0 0
        %601 = vmatprep.subr.bf16.mxu0 0
        %602 = vmatpush1.bf16.msra.mxu0 0
        %603 = vmatprep.subr.bf16.mxu0 0
        %604 = vmatpush1.bf16.msra.mxu0 0
        %605 = vmatprep.subr.bf16.mxu0 0
        %606 = vmatpush1.bf16.msra.mxu0 0
        %607 = vmatprep.subr.bf16.mxu0 0
        %608 = vmatpush1.bf16.msra.mxu0 0
        %609 = vmatprep.subr.bf16.mxu0 0
        %610 = vmatpush1.bf16.msra.mxu0 0
        %611 = vmatprep.mubr.bf16.mxu0 0
        %612 = vmatmul.mubr.bf16.gmra.mrb[0].mxu0 %v575
        %v613 = vpop.f32.mrb[0].mxu0
        %v614 = vadd.f32 %v550, %v613
        %v615 = vpop.f32.mrb[0].mxu0
        %v616 = vpop.f32.mrb[0].mxu0
        %v617 = vadd.f32 %v553, %v616
        %v618 = vpop.f32.mrb[0].mxu0
        %619 = vmatprep.mubr.bf16.mxu0 0
        %620 = vmatmul.mubr.bf16.gmra.mrb[0].mxu0 %v577
        %v621 = vpop.f32.mrb[0].mxu0
        %v622 = vadd.f32 %v558, %v621
        %v623 = vpop.f32.mrb[0].mxu0
        %v624 = vpop.f32.mrb[0].mxu0
        %v625 = vpop.f32.mrb[0].mxu0
        %626 = vdwg.mxu0
        %s627 = scalar_lea.vmem %s3, 32
        %v628 = vld [vmem:[%s627] sm:$0xf]
        %v629 = vld [vmem:[%s627 + $0x4] sm:$0xf]
        %v630 = vld [vmem:[%s627 + $0x8] sm:$0xf]
        %v631 = vld [vmem:[%s627 + $0xc] sm:$0xf]
        %vm634 = vcmask 1046528
        %v635 = vrot.slane %v470, 1
        %v636 = vrot.slane %v472, 1
        %v637 = vsel %vm634, %v635, %v636
        %v642 = vunpack.c.l.b16 %v628
        %v643 = vunpack.c.l.b16 %v629
        %v644 = vunpack.c.l.b16 %v630
        %v645 = vunpack.c.l.b16 %v631
        %v646 = vpack.c.b16 %v643, %v642
        %v647 = vpack.c.b16 %v645, %v644
        %v651 = vsel %vm508, %v637, 0
        %v654 = vsel %vm508, %v636, 0
        %656 = vmatprep.subr.bf16.mxu0 0
        %657 = vmatpush1.bf16.msra.mxu0 %v646
        %658 = vmatprep.subr.bf16.mxu0 0
        %659 = vmatpush1.bf16.msra.mxu0 %v647
        %660 = vmatprep.subr.bf16.mxu0 0
        %661 = vmatpush1.bf16.msra.mxu0 0
        %662 = vmatprep.subr.bf16.mxu0 0
        %663 = vmatpush1.bf16.msra.mxu0 0
        %664 = vmatprep.subr.bf16.mxu0 0
        %665 = vmatpush1.bf16.msra.mxu0 0
        %666 = vmatprep.subr.bf16.mxu0 0
        %667 = vmatpush1.bf16.msra.mxu0 0
        %668 = vmatprep.subr.bf16.mxu0 0
        %669 = vmatpush1.bf16.msra.mxu0 0
        %670 = vmatprep.subr.bf16.mxu0 0
        %671 = vmatpush1.bf16.msra.mxu0 0
        %672 = vmatprep.subr.bf16.mxu0 0
        %673 = vmatpush1.bf16.msra.mxu0 0
        %674 = vmatprep.subr.bf16.mxu0 0
        %675 = vmatpush1.bf16.msra.mxu0 0
        %676 = vmatprep.subr.bf16.mxu0 0
        %677 = vmatpush1.bf16.msra.mxu0 0
        %678 = vmatprep.subr.bf16.mxu0 0
        %679 = vmatpush1.bf16.msra.mxu0 0
        %680 = vmatprep.subr.bf16.mxu0 0
        %681 = vmatpush1.bf16.msra.mxu0 0
        %682 = vmatprep.subr.bf16.mxu0 0
        %683 = vmatpush1.bf16.msra.mxu0 0
        %684 = vmatprep.subr.bf16.mxu0 0
        %685 = vmatpush1.bf16.msra.mxu0 0
        %686 = vmatprep.subr.bf16.mxu0 0
        %687 = vmatpush1.bf16.msra.mxu0 0
        %688 = vmatprep.mubr.bf16.mxu0 0
        %689 = vmatmul.mubr.bf16.gmra.mrb[0].mxu0 %v651
        %v690 = vpop.f32.mrb[0].mxu0
        %v691 = vadd.f32 0.0, %v690
        %v692 = vpop.f32.mrb[0].mxu0
        %v693 = vpop.f32.mrb[0].mxu0
        %v694 = vadd.f32 0.0, %v693
        %v695 = vpop.f32.mrb[0].mxu0
        %696 = vmatprep.mubr.bf16.mxu0 0
        %697 = vmatmul.mubr.bf16.gmra.mrb[0].mxu0 %v654
        %v698 = vpop.f32.mrb[0].mxu0
        %v699 = vadd.f32 0.0, %v698
        %v700 = vpop.f32.mrb[0].mxu0
        %v701 = vpop.f32.mrb[0].mxu0
        %v702 = vpop.f32.mrb[0].mxu0
        %703 = vdwg.mxu0
        %v704 = vadd.f32 %v614, %v691
        %v705 = vadd.f32 %v617, %v694
        %v706 = vadd.f32 %v622, %v699
        %v707 = vld [vmem:[%s4] sm:$0x1]
        %v709 = vlaneseq
        %v710 = vshrl.u32 %v709, 7
        %v711 = vsub.s32 0, %v710
        %v712 = vrot.slane %v707, %v711
        %v714 = vadd.f32 %v704, %v712
        %v715 = vadd.f32 %v705, %v712
        %v716 = vadd.f32 %v706, %v712
        %s717 = ssub.s32 %s425, 1
        %v718 = vadd.s32 %v432, 8
        %v719 = vadd.s32 %v432, 16
        %v720 = vstv %s717
        %v721 = vadd.s32 %v720, %v432
        %v722 = vadd.s32 %v720, %v718
        %v723 = vadd.s32 %v720, %v719
        %vm724 = vcmp.ge.s32.totalorder %v721, 0
        %vm725 = vcmp.ge.s32.totalorder %v722, 0
        %vm726 = vcmp.ge.s32.totalorder %v723, 0
        %vm727 = vcmp.lt.s32.totalorder %v721, 40
        %vm728 = vcmp.lt.s32.totalorder %v722, 40
        %vm729 = vcmp.lt.s32.totalorder %v723, 40
        %vm730 = vmand %vm724, %vm727
        %vm731 = vmand %vm725, %vm728
        %vm732 = vmand %vm726, %vm729
        %vm733 = vcmp.gt.f32.partialorder %v714, 0.0
        %vm734 = vcmp.gt.f32.partialorder %v715, 0.0
        %vm735 = vcmp.gt.f32.partialorder %v716, 0.0
        %v736 = vsel %vm730, 1, 0
        %v737 = vsel %vm731, 1, 0
        %v738 = vsel %vm732, 1, 0
        %vm739 = vcmp.eq.s32.totalorder %v736, 1
        %vm740 = vcmp.eq.s32.totalorder %v737, 1
        %vm741 = vcmp.eq.s32.totalorder %v738, 1
        %vm742 = vmand %vm739, %vm733
        %vm743 = vmand %vm740, %vm734
        %vm744 = vmand %vm741, %vm735
        %v745 = vsel %vm742, %v714, 0.0
        %v746 = vsel %vm743, %v715, 0.0
        %v747 = vsel %vm744, %v716, 0.0
        %v748 = vpack.c.bf16 %v746, %v745
        %v749 = vpack.c.bf16 %v747, %v747
        %750 = vst [vmem:[#allocation2] sm:$0xff] %v748
        %751 = vst [vmem:[#allocation2 + $0x8] sm:$0x1] %v749
        %v752 = vld [vmem:[#allocation2] sm:$0xff]
        %v753 = vld [vmem:[%s5] sm:$0xf]
        %v754 = vld [vmem:[%s5 + $0x4] sm:$0xf]
        %v755 = vld [vmem:[%s5 + $0x8] sm:$0xf]
        %v756 = vld [vmem:[%s5 + $0xc] sm:$0xf]
        %v757 = vld [vmem:[%s5 + $0x10] sm:$0xf]
        %v758 = vld [vmem:[%s5 + $0x14] sm:$0xf]
        %v759 = vld [vmem:[%s5 + $0x18] sm:$0xf]
        %v760 = vld [vmem:[%s5 + $0x1c] sm:$0xf]
        %v761 = vld [vmem:[%s5 + $0x20] sm:$0xf]
        %v762 = vld [vmem:[%s5 + $0x24] sm:$0xf]
        %v763 = vld [vmem:[%s5 + $0x28] sm:$0xf]
        %v764 = vld [vmem:[%s5 + $0x2c] sm:$0xf]
        %v765 = vld [vmem:[%s5 + $0x30] sm:$0xf]
        %v766 = vld [vmem:[%s5 + $0x34] sm:$0xf]
        %v767 = vld [vmem:[%s5 + $0x38] sm:$0xf]
        %v768 = vld [vmem:[%s5 + $0x3c] sm:$0xf]
        %v769 = vld [vmem:[#allocation2] sm:$0xff]
        %v770 = vld [vmem:[#allocation2 + $0x8] sm:$0x1]
        %s771 = scalar_lea.vmem %s5, 64
        %v772 = vld [vmem:[%s771] sm:$0xf]
        %v773 = vld [vmem:[%s771 + $0x4] sm:$0xf]
        %v774 = vld [vmem:[%s771 + $0x8] sm:$0xf]
        %v775 = vld [vmem:[%s771 + $0xc] sm:$0xf]
        %v776 = vld [vmem:[%s771 + $0x10] sm:$0xf]
        %v777 = vld [vmem:[%s771 + $0x14] sm:$0xf]
        %v778 = vld [vmem:[%s771 + $0x18] sm:$0xf]
        %v779 = vld [vmem:[%s771 + $0x1c] sm:$0xf]
        %v780 = vld [vmem:[%s771 + $0x20] sm:$0xf]
        %v781 = vld [vmem:[%s771 + $0x24] sm:$0xf]
        %v782 = vld [vmem:[%s771 + $0x28] sm:$0xf]
        %v783 = vld [vmem:[%s771 + $0x2c] sm:$0xf]
        %v784 = vld [vmem:[%s771 + $0x30] sm:$0xf]
        %v785 = vld [vmem:[%s771 + $0x34] sm:$0xf]
        %v786 = vld [vmem:[%s771 + $0x38] sm:$0xf]
        %v787 = vld [vmem:[%s771 + $0x3c] sm:$0xf]
        %v789 = vshrl.u32 %v769, 16
        %v791 = vshll.u32 %v769, 16
        %v793 = vrot.slane %v791, 1
        %v794 = vor.u32 %v789, %v793
        %v796 = vshll.u32 %v770, 16
        %v798 = vrot.slane %v796, 1
        %v799 = vsel %vm482, %v794, %v798
        %v817 = vunpack.c.l.b16 %v772
        %v818 = vunpack.c.l.b16 %v773
        %v819 = vunpack.c.l.b16 %v774
        %v820 = vunpack.c.l.b16 %v775
        %v821 = vunpack.c.l.b16 %v776
        %v822 = vunpack.c.l.b16 %v777
        %v823 = vunpack.c.l.b16 %v778
        %v824 = vunpack.c.l.b16 %v779
        %v825 = vunpack.c.l.b16 %v780
        %v826 = vunpack.c.l.b16 %v781
        %v827 = vunpack.c.l.b16 %v782
        %v828 = vunpack.c.l.b16 %v783
        %v829 = vunpack.c.l.b16 %v784
        %v830 = vunpack.c.l.b16 %v785
        %v831 = vunpack.c.l.b16 %v786
        %v832 = vunpack.c.l.b16 %v787
        %v833 = vpack.c.b16 %v818, %v817
        %v834 = vpack.c.b16 %v820, %v819
        %v835 = vpack.c.b16 %v822, %v821
        %v836 = vpack.c.b16 %v824, %v823
        %v837 = vpack.c.b16 %v826, %v825
        %v838 = vpack.c.b16 %v828, %v827
        %v839 = vpack.c.b16 %v830, %v829
        %v840 = vpack.c.b16 %v832, %v831
        %849 = vmatprep.subr.bf16.mxu0 0
        %850 = vmatpush1.bf16.msra.mxu0 %v833
        %851 = vmatprep.subr.bf16.mxu0 0
        %852 = vmatpush1.bf16.msra.mxu0 %v834
        %853 = vmatprep.subr.bf16.mxu0 0
        %854 = vmatpush1.bf16.msra.mxu0 %v835
        %855 = vmatprep.subr.bf16.mxu0 0
        %856 = vmatpush1.bf16.msra.mxu0 %v836
        %857 = vmatprep.subr.bf16.mxu0 0
        %858 = vmatpush1.bf16.msra.mxu0 %v837
        %859 = vmatprep.subr.bf16.mxu0 0
        %860 = vmatpush1.bf16.msra.mxu0 %v838
        %861 = vmatprep.subr.bf16.mxu0 0
        %862 = vmatpush1.bf16.msra.mxu0 %v839
        %863 = vmatprep.subr.bf16.mxu0 0
        %864 = vmatpush1.bf16.msra.mxu0 %v840
        %865 = vmatprep.subr.bf16.mxu0 0
        %866 = vmatpush1.bf16.msra.mxu0 0
        %867 = vmatprep.subr.bf16.mxu0 0
        %868 = vmatpush1.bf16.msra.mxu0 0
        %869 = vmatprep.subr.bf16.mxu0 0
        %870 = vmatpush1.bf16.msra.mxu0 0
        %871 = vmatprep.subr.bf16.mxu0 0
        %872 = vmatpush1.bf16.msra.mxu0 0
        %873 = vmatprep.subr.bf16.mxu0 0
        %874 = vmatpush1.bf16.msra.mxu0 0
        %875 = vmatprep.subr.bf16.mxu0 0
        %876 = vmatpush1.bf16.msra.mxu0 0
        %877 = vmatprep.subr.bf16.mxu0 0
        %878 = vmatpush1.bf16.msra.mxu0 0
        %879 = vmatprep.subr.bf16.mxu0 0
        %880 = vmatpush1.bf16.msra.mxu0 0
        %881 = vmatprep.mubr.bf16.mxu0 0
        %882 = vmatmul.mubr.bf16.gmra.mrb[0].mxu0 %v799
        %v883 = vpop.f32.mrb[0].mxu0
        %v884 = vadd.f32 0.0, %v883
        %v885 = vpop.f32.mrb[0].mxu0
        %v886 = vpop.f32.mrb[0].mxu0
        %v887 = vadd.f32 0.0, %v886
        %v888 = vpop.f32.mrb[0].mxu0
        %889 = vdwg.mxu0
        %v906 = vunpack.c.l.b16 %v753
        %v907 = vunpack.c.l.b16 %v754
        %v908 = vunpack.c.l.b16 %v755
        %v909 = vunpack.c.l.b16 %v756
        %v910 = vunpack.c.l.b16 %v757
        %v911 = vunpack.c.l.b16 %v758
        %v912 = vunpack.c.l.b16 %v759
        %v913 = vunpack.c.l.b16 %v760
        %v914 = vunpack.c.l.b16 %v761
        %v915 = vunpack.c.l.b16 %v762
        %v916 = vunpack.c.l.b16 %v763
        %v917 = vunpack.c.l.b16 %v764
        %v918 = vunpack.c.l.b16 %v765
        %v919 = vunpack.c.l.b16 %v766
        %v920 = vunpack.c.l.b16 %v767
        %v921 = vunpack.c.l.b16 %v768
        %v922 = vpack.c.b16 %v907, %v906
        %v923 = vpack.c.b16 %v909, %v908
        %v924 = vpack.c.b16 %v911, %v910
        %v925 = vpack.c.b16 %v913, %v912
        %v926 = vpack.c.b16 %v915, %v914
        %v927 = vpack.c.b16 %v917, %v916
        %v928 = vpack.c.b16 %v919, %v918
        %v929 = vpack.c.b16 %v921, %v920
        %938 = vmatprep.subr.bf16.mxu0 0
        %939 = vmatpush1.bf16.msra.mxu0 %v922
        %940 = vmatprep.subr.bf16.mxu0 0
        %941 = vmatpush1.bf16.msra.mxu0 %v923
        %942 = vmatprep.subr.bf16.mxu0 0
        %943 = vmatpush1.bf16.msra.mxu0 %v924
        %944 = vmatprep.subr.bf16.mxu0 0
        %945 = vmatpush1.bf16.msra.mxu0 %v925
        %946 = vmatprep.subr.bf16.mxu0 0
        %947 = vmatpush1.bf16.msra.mxu0 %v926
        %948 = vmatprep.subr.bf16.mxu0 0
        %949 = vmatpush1.bf16.msra.mxu0 %v927
        %950 = vmatprep.subr.bf16.mxu0 0
        %951 = vmatpush1.bf16.msra.mxu0 %v928
        %952 = vmatprep.subr.bf16.mxu0 0
        %953 = vmatpush1.bf16.msra.mxu0 %v929
        %954 = vmatprep.subr.bf16.mxu0 0
        %955 = vmatpush1.bf16.msra.mxu0 0
        %956 = vmatprep.subr.bf16.mxu0 0
        %957 = vmatpush1.bf16.msra.mxu0 0
        %958 = vmatprep.subr.bf16.mxu0 0
        %959 = vmatpush1.bf16.msra.mxu0 0
        %960 = vmatprep.subr.bf16.mxu0 0
        %961 = vmatpush1.bf16.msra.mxu0 0
        %962 = vmatprep.subr.bf16.mxu0 0
        %963 = vmatpush1.bf16.msra.mxu0 0
        %964 = vmatprep.subr.bf16.mxu0 0
        %965 = vmatpush1.bf16.msra.mxu0 0
        %966 = vmatprep.subr.bf16.mxu0 0
        %967 = vmatpush1.bf16.msra.mxu0 0
        %968 = vmatprep.subr.bf16.mxu0 0
        %969 = vmatpush1.bf16.msra.mxu0 0
        %970 = vmatprep.mubr.bf16.mxu0 0
        %971 = vmatmul.mubr.bf16.gmra.mrb[0].mxu0 %v752
        %v972 = vpop.f32.mrb[0].mxu0
        %v973 = vadd.f32 %v884, %v972
        %v974 = vpop.f32.mrb[0].mxu0
        %v975 = vpop.f32.mrb[0].mxu0
        %v976 = vadd.f32 %v887, %v975
        %v977 = vpop.f32.mrb[0].mxu0
        %978 = vdwg.mxu0
        %v979 = vld [vmem:[#allocation2] sm:$0xfe]
        %s980 = scalar_lea.vmem %s5, 128
        %v981 = vld [vmem:[%s980] sm:$0xf]
        %v982 = vld [vmem:[%s980 + $0x4] sm:$0xf]
        %v983 = vld [vmem:[%s980 + $0x8] sm:$0xf]
        %v984 = vld [vmem:[%s980 + $0xc] sm:$0xf]
        %v985 = vld [vmem:[%s980 + $0x10] sm:$0xf]
        %v986 = vld [vmem:[%s980 + $0x14] sm:$0xf]
        %v987 = vld [vmem:[%s980 + $0x18] sm:$0xf]
        %v988 = vld [vmem:[%s980 + $0x1c] sm:$0xf]
        %v989 = vld [vmem:[%s980 + $0x20] sm:$0xf]
        %v990 = vld [vmem:[%s980 + $0x24] sm:$0xf]
        %v991 = vld [vmem:[%s980 + $0x28] sm:$0xf]
        %v992 = vld [vmem:[%s980 + $0x2c] sm:$0xf]
        %v993 = vld [vmem:[%s980 + $0x30] sm:$0xf]
        %v994 = vld [vmem:[%s980 + $0x34] sm:$0xf]
        %v995 = vld [vmem:[%s980 + $0x38] sm:$0xf]
        %v996 = vld [vmem:[%s980 + $0x3c] sm:$0xf]
        %v999 = vrot.slane %v979, 1
        %v1000 = vrot.slane %v770, 1
        %v1001 = vsel %vm634, %v999, %v1000
        %v1019 = vunpack.c.l.b16 %v981
        %v1020 = vunpack.c.l.b16 %v982
        %v1021 = vunpack.c.l.b16 %v983
        %v1022 = vunpack.c.l.b16 %v984
        %v1023 = vunpack.c.l.b16 %v985
        %v1024 = vunpack.c.l.b16 %v986
        %v1025 = vunpack.c.l.b16 %v987
        %v1026 = vunpack.c.l.b16 %v988
        %v1027 = vunpack.c.l.b16 %v989
        %v1028 = vunpack.c.l.b16 %v990
        %v1029 = vunpack.c.l.b16 %v991
        %v1030 = vunpack.c.l.b16 %v992
        %v1031 = vunpack.c.l.b16 %v993
        %v1032 = vunpack.c.l.b16 %v994
        %v1033 = vunpack.c.l.b16 %v995
        %v1034 = vunpack.c.l.b16 %v996
        %v1035 = vpack.c.b16 %v1020, %v1019
        %v1036 = vpack.c.b16 %v1022, %v1021
        %v1037 = vpack.c.b16 %v1024, %v1023
        %v1038 = vpack.c.b16 %v1026, %v1025
        %v1039 = vpack.c.b16 %v1028, %v1027
        %v1040 = vpack.c.b16 %v1030, %v1029
        %v1041 = vpack.c.b16 %v1032, %v1031
        %v1042 = vpack.c.b16 %v1034, %v1033
        %1051 = vmatprep.subr.bf16.mxu0 0
        %1052 = vmatpush1.bf16.msra.mxu0 %v1035
        %1053 = vmatprep.subr.bf16.mxu0 0
        %1054 = vmatpush1.bf16.msra.mxu0 %v1036
        %1055 = vmatprep.subr.bf16.mxu0 0
        %1056 = vmatpush1.bf16.msra.mxu0 %v1037
        %1057 = vmatprep.subr.bf16.mxu0 0
        %1058 = vmatpush1.bf16.msra.mxu0 %v1038
        %1059 = vmatprep.subr.bf16.mxu0 0
        %1060 = vmatpush1.bf16.msra.mxu0 %v1039
        %1061 = vmatprep.subr.bf16.mxu0 0
        %1062 = vmatpush1.bf16.msra.mxu0 %v1040
        %1063 = vmatprep.subr.bf16.mxu0 0
        %1064 = vmatpush1.bf16.msra.mxu0 %v1041
        %1065 = vmatprep.subr.bf16.mxu0 0
        %1066 = vmatpush1.bf16.msra.mxu0 %v1042
        %1067 = vmatprep.subr.bf16.mxu0 0
        %1068 = vmatpush1.bf16.msra.mxu0 0
        %1069 = vmatprep.subr.bf16.mxu0 0
        %1070 = vmatpush1.bf16.msra.mxu0 0
        %1071 = vmatprep.subr.bf16.mxu0 0
        %1072 = vmatpush1.bf16.msra.mxu0 0
        %1073 = vmatprep.subr.bf16.mxu0 0
        %1074 = vmatpush1.bf16.msra.mxu0 0
        %1075 = vmatprep.subr.bf16.mxu0 0
        %1076 = vmatpush1.bf16.msra.mxu0 0
        %1077 = vmatprep.subr.bf16.mxu0 0
        %1078 = vmatpush1.bf16.msra.mxu0 0
        %1079 = vmatprep.subr.bf16.mxu0 0
        %1080 = vmatpush1.bf16.msra.mxu0 0
        %1081 = vmatprep.subr.bf16.mxu0 0
        %1082 = vmatpush1.bf16.msra.mxu0 0
        %1083 = vmatprep.mubr.bf16.mxu0 0
        %1084 = vmatmul.mubr.bf16.gmra.mrb[0].mxu0 %v1001
        %v1085 = vpop.f32.mrb[0].mxu0
        %v1086 = vadd.f32 0.0, %v1085
        %v1087 = vpop.f32.mrb[0].mxu0
        %v1088 = vpop.f32.mrb[0].mxu0
        %v1089 = vadd.f32 0.0, %v1088
        %v1090 = vpop.f32.mrb[0].mxu0
        %1091 = vdwg.mxu0
        %v1092 = vadd.f32 %v973, %v1086
        %v1093 = vadd.f32 %v976, %v1089
        %v1094 = vld [vmem:[%s6] sm:$0x1]
        %v1096 = vlaneseq
        %v1097 = vshrl.u32 %v1096, 7
        %v1098 = vsub.s32 0, %v1097
        %v1099 = vrot.slane %v1094, %v1098
        %v1101 = vadd.f32 %v1092, %v1099
        %v1102 = vadd.f32 %v1093, %v1099
        %1103 = vst [vmem:[%s378] sm:$0xff] %v1101
        %1104 = vst [vmem:[%s378 + $0x8] sm:$0xff] %v1102
        %s1105 = sand.u32 %s223, 1
        %s1106 = scalar_lea.sflag [#allocation4], %s1105
        %s1107 = sand.u32 %s223, 1
        %s1108 = smul.addr %s1107, 16
        %s1109 = scalar_lea.vmem [#allocation3], %s1108
        // Predicated region
        $region49: #{tpu_custom_call.1} parent=47 // pred_check
          %p1110 = pneg %p233
        $region50: #{tpu_custom_call.1} parent=47 // pred_check_branch
          %1112 = sbr.rel (%p1110) target = $region52
        $region51: #{tpu_custom_call.1} parent=47 // pred_region
          %s1113 = smul.u32 2, %s26
          %s1115 = ssub.s32 256, 256
          %1116 = vsyncadd %s1106, %s1115
          %s1117 = smul.addr %s25, 6
          %s1118 = sadd.s32 %s1113, %s1117
          %s1119 = smul.addr %s1118, 128
          %s1120 = scalar_lea.hbm %s7, %s1119
          %s1121 = sshll.u32 %s1109, 4
          %s1122 = int_to_ptr.vmem [resolvable:$true] %s1121
          %1127 = dma.vmem_to_hbm [thread:$0]  %s1122, 256, %s1120, %s1106, 128, 128, 8
        $region52: #{tpu_custom_call.1} parent=47 // pred_fallthru
          _
      $region48: #{tpu_custom_call.1} parent=5 // pred_fallthru
        _
      %p1128 = scmp.le.s32.totalorder 2, %s16
      // Predicated region
      $region53: #{tpu_custom_call.1} parent=5 // pred_check
        %p1129 = pneg %p1128
      $region54: #{tpu_custom_call.1} parent=5 // pred_check_branch
        %1131 = sbr.rel (%p1129) target = $region56
      $region55: #{tpu_custom_call.1} parent=5 // pred_region
        %s1132 = ssub.s32 %s16, 2
        // Predicated region
        $region57: #{tpu_custom_call.1} parent=55 // pred_check
          %p1133 = pneg %p239
        $region58: #{tpu_custom_call.1} parent=55 // pred_check_branch
          %1135 = sbr.rel (%p1133) target = $region60
        $region59: #{tpu_custom_call.1} parent=55 // pred_region
          %s1136 = sand.u32 %s224, 1
          %s1137 = scalar_lea.sflag [#allocation4], %s1136
          %s1138 = sand.u32 %s224, 1
          %s1139 = smul.addr %s1138, 16
          %s1140 = scalar_lea.vmem [#allocation3], %s1139
          %1141 = dma.done %s1137, 256
        $region60: #{tpu_custom_call.1} parent=55 // pred_fallthru
          _
      $region56: #{tpu_custom_call.1} parent=5 // pred_fallthru
        _
    $region6: #{tpu_custom_call.1} parent=1 // loop_footer
      %s20 = sadd.s32 1, %s16
    $region7: #{tpu_custom_call.1} parent=1 // loop_footer_branch
      %15 = sbr.rel target = $region3
    $region8: #{tpu_custom_call.1} parent=1 // loop_exit
      _
    %1142 = vsyncpa [#allocation4], 1
    %s1143 = scalar_lea.sflag [#allocation4], 1
    %1144 = vsyncpa %s1143, 1

</llo_original>
